<compile_context>
chip_gen: v7x
topology: tpu7x:2x2x1
jax: 0.10.0
libtpu: 0.0.40
codegen_flags: <defaults>
</compile_context>

<pallas_src>
import jax
import jax.numpy as jnp
from jax.experimental import pallas as pl
from jax.experimental.pallas import tpu as pltpu


def _attention_kernel(q_ref, tf_ref, w_ref, out_ref):
    """One grid step = P problems.

    q_ref  : (P, B, D)  matmul dtype (bf16 by default)
    tf_ref : (P, L, T)  matmul dtype
    w_ref  : (D, T)     matmul dtype; same block every step (VMEM-resident)
    out_ref: (2, B, P*L) f32; channel 0 = softmax weights, channel 1 = raw
             scores; problem p occupies lanes [p*L, (p+1)*L).
    """
    q = q_ref[...]
    tf = tf_ref[...]
    w = w_ref[...]
    P, _, _ = q.shape
    L = tf.shape[1]

    # Reassociated module math (identical result, no (L, D) intermediate):
    #   scores = (q @ W) @ tf^T    (contract D, then contract T).
    # W is shared by all P problems: replicate along the leading (batch) axis so
    # both matmuls are plain batched 3-D dots (the well-supported MXU path;
    # no in-kernel transposes or sublane-merging reshapes).
    w_b = jnp.broadcast_to(w[None], (P,) + w.shape)                    # (P, D, T)
    qw = jnp.einsum("pbd,pdt->pbt", q, w_b,
                    preferred_element_type=jnp.float32)                # (P, B, T) f32
    scores = jnp.einsum("pbt,plt->pbl", qw.astype(tf.dtype), tf,
                        preferred_element_type=jnp.float32)            # (P, B, L) f32

    # Softmax over L, f32 throughout, exact divide (cost invisible at this size).
    m = jnp.max(scores, axis=-1, keepdims=True)
    e = jnp.exp(scores - m)
    weights = e / jnp.sum(e, axis=-1, keepdims=True)

    # Pack both outputs into the lane-dense block.  Static slice stores keep
    # the data in its natural (P, B, L) register layout (no in-register
    # transpose / relayout); the HBM writeback of the (2, B, P*L) block is one
    # dense DMA per step.
    for p in range(P):                     # P is a trace-time constant (unrolled)
        lanes = slice(p * L, (p + 1) * L)
        out_ref[0, :, lanes] = weights[p]
        out_ref[1, :, lanes] = scores[p]


def attention_batched(query, text_feat, w_main, *, problems_per_step=None,
                      matmul_dtype=jnp.bfloat16):
    """N independent attention problems sharing one projection weight.

    query:     (N, B, D)
    text_feat: (N, L, T)
    w_main:    (D, T)   (nn.Linear(text_dim, dimensions, bias=False).weight layout)

    Returns (weights (N, B, 1, L), scores (N, B, L)) — per problem, exactly the
    two tensors the PyTorch module's forward returns.
    """
    N, B, D = query.shape
    N2, L, T = text_feat.shape
    assert N2 == N and w_main.shape == (D, T)

    # Problems per grid step: smallest divisor of N whose packed output width
    # P*L is a multiple of 128 lanes (lane-dense writeback); otherwise one step.
    if problems_per_step is None:
        problems_per_step = N
        for cand in range(1, N + 1):
            if N % cand == 0 and (cand * L) % 128 == 0:
                problems_per_step = cand
                break
    P = problems_per_step
    assert N % P == 0, "problems_per_step must divide N"
    assert (P * L) % 128 == 0 or P == N, \
        "output block must be 128-lane aligned or cover the whole array"

    q = query.astype(matmul_dtype)
    tf = text_feat.astype(matmul_dtype)
    w = w_main.astype(matmul_dtype)

    flops = int(N * (2 * B * D * T + 2 * B * T * L + 4 * B * L))
    bytes_accessed = int((q.size + tf.size + w.size) * q.dtype.itemsize
                         + 2 * N * B * L * 4)

    packed = pl.pallas_call(
        _attention_kernel,
        out_shape=jax.ShapeDtypeStruct((2, B, N * L), jnp.float32),
        grid=(N // P,),
        in_specs=[
            pl.BlockSpec((P, B, D), lambda i: (i, 0, 0)),
            pl.BlockSpec((P, L, T), lambda i: (i, 0, 0)),
            pl.BlockSpec((D, T), lambda i: (0, 0)),      # same block every step -> resident
        ],
        out_specs=pl.BlockSpec((2, B, P * L), lambda i: (0, 0, i)),
        compiler_params=pltpu.CompilerParams(
            dimension_semantics=("parallel",),           # v7x: shard problems over both TCs
            vmem_limit_bytes=32 * 1024 * 1024,           # explicit; fits all generations
        ),
        cost_estimate=pl.CostEstimate(flops=flops, transcendentals=N * B * L,
                                      bytes_accessed=bytes_accessed),
    )(q, tf, w)

    # Unpack the lane-dense slab (wrapper-side layout plumbing only).
    packed = packed.reshape(2, B, N, L)
    weights = jnp.transpose(packed[0], (1, 0, 2))[:, :, None, :]     # (N, B, 1, L)
    scores = jnp.transpose(packed[1], (1, 0, 2))                     # (N, B, L)
    return weights, scores


def attention_forward(query, text_feat, w_main, *, matmul_dtype=jnp.bfloat16):
    """Forward of the PyTorch `Attention` module for a single problem.

    query: (B, D); text_feat: (1, L, T) or (L, T); w_main: (D, T).
    Returns (attention_weights (B, 1, L), attention_scores (B, L)).
    """
    if text_feat.ndim == 3:
        assert text_feat.shape[0] == 1, "forward() expands a batch-1 text tensor"
        text_feat = text_feat[0]
    weights, scores = attention_batched(query[None], text_feat[None], w_main,
                                        problems_per_step=1,
                                        matmul_dtype=matmul_dtype)
    return weights[0], scores[0]


if __name__ == "__main__":
    # Shapes consistent with the module's forward:
    #   batch B=2, query_len L=8, dimensions D=32, text_dim T=64,
    #   N=32 independent problems batched into one pallas_call (P=16 per step).
    B, L, D, T = 2, 8, 32, 64
    N = 32

    key = jax.random.PRNGKey(0)
    k_q, k_tf, k_w = jax.random.split(key, 3)
    query = jax.random.normal(k_q, (N, B, D), dtype=jnp.float32)
    text_feat = jax.random.normal(k_tf, (N, L, T), dtype=jnp.float32)
    w_main = jax.random.normal(k_w, (D, T), dtype=jnp.float32) * 0.02

    weights, scores = attention_batched(query, text_feat, w_main)
    jax.block_until_ready((weights, scores))
    assert weights.shape == (N, B, 1, L) and scores.shape == (N, B, L)

    hp = jax.lax.Precision.HIGHEST

    # Reference 1: mirror the kernel math exactly (bf16 matmul operands, f32
    # accumulation and softmax) — remaining diffs are summation-order only.
    qb = query.astype(jnp.bfloat16).astype(jnp.float32)
    tb = text_feat.astype(jnp.bfloat16).astype(jnp.float32)
    wb = w_main.astype(jnp.bfloat16).astype(jnp.float32)
    qw_ref = jnp.einsum("nbd,dt->nbt", qb, wb, precision=hp)
    qw_ref = qw_ref.astype(jnp.bfloat16).astype(jnp.float32)
    scores_ref = jnp.einsum("nbt,nlt->nbl", qw_ref, tb, precision=hp)
    weights_ref = jax.nn.softmax(scores_ref, axis=-1)
    assert jnp.allclose(scores, scores_ref, atol=2e-3, rtol=2e-3)
    assert jnp.allclose(weights[:, :, 0, :], weights_ref, atol=2e-3, rtol=2e-3)

    # Reference 2: the PyTorch module math in full f32 (original association);
    # the only deviation is the bf16 rounding of the matmul operands.
    ctx = jnp.einsum("nlt,dt->nld", text_feat, w_main, precision=hp)
    scores_f32 = jnp.einsum("nbd,nld->nbl", query, ctx, precision=hp)
    weights_f32 = jax.nn.softmax(scores_f32, axis=-1)
    assert jnp.allclose(scores, scores_f32, atol=5e-2, rtol=5e-2)
    assert jnp.allclose(weights[:, :, 0, :], weights_f32, atol=5e-2, rtol=5e-2)

    # Single-problem (module-signature) path agrees with the batched path.
    w0, s0 = attention_forward(query[0], text_feat[0:1], w_main)
    jax.block_until_ready((w0, s0))
    assert w0.shape == (B, 1, L) and s0.shape == (B, L)
    assert jnp.allclose(s0, scores[0], atol=1e-5, rtol=1e-5)
    assert jnp.allclose(w0, weights[0], atol=1e-5, rtol=1e-5)

    print("KERNEL_OK")
</pallas_src>

<mosaic_0001>
module attributes {stable_mosaic.version = 11 : i64} {
  func.func @_attention_kernel(%arg0: i32, %arg1: memref<16x2x32xbf16, #tpu.memory_space<vmem>>, %arg2: memref<16x8x64xbf16, #tpu.memory_space<vmem>>, %arg3: memref<32x64xbf16, #tpu.memory_space<vmem>>, %arg4: memref<2x2x128xf32, #tpu.memory_space<vmem>>) attributes {dimension_semantics = [#tpu.dimension_semantics<parallel>], iteration_bounds = array<i64: 2>, scalar_prefetch = 0 : i64, scratch_operands = 0 : i64, tpu.core_type = #tpu.core_type<tc>, window_params = [{transform_indices = @transform_0, window_bounds = array<i64: 16, 2, 32>}, {transform_indices = @transform_1, window_bounds = array<i64: 16, 8, 64>}, {pipeline_mode = #tpu.pipeline_mode<synchronous>, transform_indices = @transform_2, window_bounds = array<i64: 32, 64>}, {transform_indices = @transform_3, window_bounds = array<i64: 2, 2, 128>}]} {
    %c0 = arith.constant 0 : index
    %c0_0 = arith.constant 0 : index
    %c0_1 = arith.constant 0 : index
    %0 = vector.load %arg1[%c0, %c0_0, %c0_1] : memref<16x2x32xbf16, #tpu.memory_space<vmem>>, vector<16x2x32xbf16>
    %c0_2 = arith.constant 0 : index
    %c0_3 = arith.constant 0 : index
    %c0_4 = arith.constant 0 : index
    %1 = vector.load %arg2[%c0_2, %c0_3, %c0_4] : memref<16x8x64xbf16, #tpu.memory_space<vmem>>, vector<16x8x64xbf16>
    %c0_5 = arith.constant 0 : index
    %c0_6 = arith.constant 0 : index
    %2 = vector.load %arg3[%c0_5, %c0_6] : memref<32x64xbf16, #tpu.memory_space<vmem>>, vector<32x64xbf16>
    %3 = vector.shape_cast %2 : vector<32x64xbf16> to vector<1x32x64xbf16>
    %4 = vector.shape_cast %3 : vector<1x32x64xbf16> to vector<1x32x64xbf16>
    %5 = vector.broadcast %4 : vector<1x32x64xbf16> to vector<16x32x64xbf16>
    "tpu.trace_start"() <{level = 10 : i32, message = "pbd,pdt->pbt"}> : () -> ()
    %cst = arith.constant dense<0.000000e+00> : vector<16x2x64xf32>
    %6 = tpu.matmul %0, %5, %cst {dimension_numbers = #tpu.dot_dimension_numbers<[2], [1], [1], [2], [0, 0, 0, 1, 1, 2], [0], [0]>} : vector<16x2x32xbf16>, vector<16x32x64xbf16>, vector<16x2x64xf32> -> vector<16x2x64xf32>
    "tpu.trace_stop"() : () -> ()
    %7 = arith.truncf %6 : vector<16x2x64xf32> to vector<16x2x64xbf16>
    "tpu.trace_start"() <{level = 10 : i32, message = "pbt,plt->pbl"}> : () -> ()
    %cst_7 = arith.constant dense<0.000000e+00> : vector<16x2x8xf32>
    %8 = tpu.matmul %7, %1, %cst_7 {dimension_numbers = #tpu.dot_dimension_numbers<[2], [2], [1], [1], [0, 0, 0, 1, 1, 1], [0], [0]>} : vector<16x2x64xbf16>, vector<16x8x64xbf16>, vector<16x2x8xf32> -> vector<16x2x8xf32>
    "tpu.trace_stop"() : () -> ()
    %cst_8 = arith.constant dense<0xFF800000> : vector<16x2xf32>
    %9 = vector.multi_reduction <maximumf>, %8, %cst_8 [2] : vector<16x2x8xf32> to vector<16x2xf32>
    %10 = vector.shape_cast %9 : vector<16x2xf32> to vector<16x2x1xf32>
    %11 = vector.broadcast %10 : vector<16x2x1xf32> to vector<16x2x8xf32>
    %12 = arith.subf %8, %11 : vector<16x2x8xf32>
    %13 = math.exp %12 : vector<16x2x8xf32>
    %cst_9 = arith.constant dense<0.000000e+00> : vector<16x2xf32>
    %14 = vector.multi_reduction <add>, %13, %cst_9 [2] : vector<16x2x8xf32> to vector<16x2xf32>
    %15 = vector.shape_cast %14 : vector<16x2xf32> to vector<16x2x1xf32>
    %16 = vector.broadcast %15 : vector<16x2x1xf32> to vector<16x2x8xf32>
    %17 = arith.divf %13, %16 : vector<16x2x8xf32>
    %18 = vector.extract_strided_slice %17 {offsets = [0, 0, 0], sizes = [1, 2, 8], strides = [1, 1, 1]} : vector<16x2x8xf32> to vector<1x2x8xf32>
    %19 = vector.shape_cast %18 : vector<1x2x8xf32> to vector<2x8xf32>
    %c0_10 = arith.constant 0 : index
    %c0_11 = arith.constant 0 : index
    %c0_12 = arith.constant 0 : index
    %20 = vector.load %arg4[%c0_10, %c0_11, %c0_12] : memref<2x2x128xf32, #tpu.memory_space<vmem>>, vector<1x2x8xf32>
    %21 = vector.shape_cast %20 : vector<1x2x8xf32> to vector<2x8xf32>
    %22 = vector.shape_cast %19 : vector<2x8xf32> to vector<1x2x8xf32>
    tpu.vector_store %arg4[%c0_10, %c0_11, %c0_12], %22 {strides = array<i32>} : memref<2x2x128xf32, #tpu.memory_space<vmem>>, vector<1x2x8xf32>,
    %23 = vector.extract_strided_slice %8 {offsets = [0, 0, 0], sizes = [1, 2, 8], strides = [1, 1, 1]} : vector<16x2x8xf32> to vector<1x2x8xf32>
    %24 = vector.shape_cast %23 : vector<1x2x8xf32> to vector<2x8xf32>
    %c1 = arith.constant 1 : index
    %c0_13 = arith.constant 0 : index
    %c0_14 = arith.constant 0 : index
    %25 = vector.load %arg4[%c1, %c0_13, %c0_14] : memref<2x2x128xf32, #tpu.memory_space<vmem>>, vector<1x2x8xf32>
    %26 = vector.shape_cast %25 : vector<1x2x8xf32> to vector<2x8xf32>
    %27 = vector.shape_cast %24 : vector<2x8xf32> to vector<1x2x8xf32>
    tpu.vector_store %arg4[%c1, %c0_13, %c0_14], %27 {strides = array<i32>} : memref<2x2x128xf32, #tpu.memory_space<vmem>>, vector<1x2x8xf32>,
    %28 = vector.extract_strided_slice %17 {offsets = [1, 0, 0], sizes = [1, 2, 8], strides = [1, 1, 1]} : vector<16x2x8xf32> to vector<1x2x8xf32>
    %29 = vector.shape_cast %28 : vector<1x2x8xf32> to vector<2x8xf32>
    %c0_15 = arith.constant 0 : index
    %c0_16 = arith.constant 0 : index
    %c8 = arith.constant 8 : index
    %30 = vector.load %arg4[%c0_15, %c0_16, %c8] : memref<2x2x128xf32, #tpu.memory_space<vmem>>, vector<1x2x8xf32>
    %31 = vector.shape_cast %30 : vector<1x2x8xf32> to vector<2x8xf32>
    %32 = vector.shape_cast %29 : vector<2x8xf32> to vector<1x2x8xf32>
    tpu.vector_store %arg4[%c0_15, %c0_16, %c8], %32 {strides = array<i32>} : memref<2x2x128xf32, #tpu.memory_space<vmem>>, vector<1x2x8xf32>,
    %33 = vector.extract_strided_slice %8 {offsets = [1, 0, 0], sizes = [1, 2, 8], strides = [1, 1, 1]} : vector<16x2x8xf32> to vector<1x2x8xf32>
    %34 = vector.shape_cast %33 : vector<1x2x8xf32> to vector<2x8xf32>
    %c1_17 = arith.constant 1 : index
    %c0_18 = arith.constant 0 : index
    %c8_19 = arith.constant 8 : index
    %35 = vector.load %arg4[%c1_17, %c0_18, %c8_19] : memref<2x2x128xf32, #tpu.memory_space<vmem>>, vector<1x2x8xf32>
    %36 = vector.shape_cast %35 : vector<1x2x8xf32> to vector<2x8xf32>
    %37 = vector.shape_cast %34 : vector<2x8xf32> to vector<1x2x8xf32>
    tpu.vector_store %arg4[%c1_17, %c0_18, %c8_19], %37 {strides = array<i32>} : memref<2x2x128xf32, #tpu.memory_space<vmem>>, vector<1x2x8xf32>,
    %38 = vector.extract_strided_slice %17 {offsets = [2, 0, 0], sizes = [1, 2, 8], strides = [1, 1, 1]} : vector<16x2x8xf32> to vector<1x2x8xf32>
    %39 = vector.shape_cast %38 : vector<1x2x8xf32> to vector<2x8xf32>
    %c0_20 = arith.constant 0 : index
    %c0_21 = arith.constant 0 : index
    %c16 = arith.constant 16 : index
    %40 = vector.load %arg4[%c0_20, %c0_21, %c16] : memref<2x2x128xf32, #tpu.memory_space<vmem>>, vector<1x2x8xf32>
    %41 = vector.shape_cast %40 : vector<1x2x8xf32> to vector<2x8xf32>
    %42 = vector.shape_cast %39 : vector<2x8xf32> to vector<1x2x8xf32>
    tpu.vector_store %arg4[%c0_20, %c0_21, %c16], %42 {strides = array<i32>} : memref<2x2x128xf32, #tpu.memory_space<vmem>>, vector<1x2x8xf32>,
    %43 = vector.extract_strided_slice %8 {offsets = [2, 0, 0], sizes = [1, 2, 8], strides = [1, 1, 1]} : vector<16x2x8xf32> to vector<1x2x8xf32>
    %44 = vector.shape_cast %43 : vector<1x2x8xf32> to vector<2x8xf32>
    %c1_22 = arith.constant 1 : index
    %c0_23 = arith.constant 0 : index
    %c16_24 = arith.constant 16 : index
    %45 = vector.load %arg4[%c1_22, %c0_23, %c16_24] : memref<2x2x128xf32, #tpu.memory_space<vmem>>, vector<1x2x8xf32>
    %46 = vector.shape_cast %45 : vector<1x2x8xf32> to vector<2x8xf32>
    %47 = vector.shape_cast %44 : vector<2x8xf32> to vector<1x2x8xf32>
    tpu.vector_store %arg4[%c1_22, %c0_23, %c16_24], %47 {strides = array<i32>} : memref<2x2x128xf32, #tpu.memory_space<vmem>>, vector<1x2x8xf32>,
    %48 = vector.extract_strided_slice %17 {offsets = [3, 0, 0], sizes = [1, 2, 8], strides = [1, 1, 1]} : vector<16x2x8xf32> to vector<1x2x8xf32>
    %49 = vector.shape_cast %48 : vector<1x2x8xf32> to vector<2x8xf32>
    %c0_25 = arith.constant 0 : index
    %c0_26 = arith.constant 0 : index
    %c24 = arith.constant 24 : index
    %50 = vector.load %arg4[%c0_25, %c0_26, %c24] : memref<2x2x128xf32, #tpu.memory_space<vmem>>, vector<1x2x8xf32>
    %51 = vector.shape_cast %50 : vector<1x2x8xf32> to vector<2x8xf32>
    %52 = vector.shape_cast %49 : vector<2x8xf32> to vector<1x2x8xf32>
    tpu.vector_store %arg4[%c0_25, %c0_26, %c24], %52 {strides = array<i32>} : memref<2x2x128xf32, #tpu.memory_space<vmem>>, vector<1x2x8xf32>,
    %53 = vector.extract_strided_slice %8 {offsets = [3, 0, 0], sizes = [1, 2, 8], strides = [1, 1, 1]} : vector<16x2x8xf32> to vector<1x2x8xf32>
    %54 = vector.shape_cast %53 : vector<1x2x8xf32> to vector<2x8xf32>
    %c1_27 = arith.constant 1 : index
    %c0_28 = arith.constant 0 : index
    %c24_29 = arith.constant 24 : index
    %55 = vector.load %arg4[%c1_27, %c0_28, %c24_29] : memref<2x2x128xf32, #tpu.memory_space<vmem>>, vector<1x2x8xf32>
    %56 = vector.shape_cast %55 : vector<1x2x8xf32> to vector<2x8xf32>
    %57 = vector.shape_cast %54 : vector<2x8xf32> to vector<1x2x8xf32>
    tpu.vector_store %arg4[%c1_27, %c0_28, %c24_29], %57 {strides = array<i32>} : memref<2x2x128xf32, #tpu.memory_space<vmem>>, vector<1x2x8xf32>,
    %58 = vector.extract_strided_slice %17 {offsets = [4, 0, 0], sizes = [1, 2, 8], strides = [1, 1, 1]} : vector<16x2x8xf32> to vector<1x2x8xf32>
    %59 = vector.shape_cast %58 : vector<1x2x8xf32> to vector<2x8xf32>
    %c0_30 = arith.constant 0 : index
    %c0_31 = arith.constant 0 : index
    %c32 = arith.constant 32 : index
    %60 = vector.load %arg4[%c0_30, %c0_31, %c32] : memref<2x2x128xf32, #tpu.memory_space<vmem>>, vector<1x2x8xf32>
    %61 = vector.shape_cast %60 : vector<1x2x8xf32> to vector<2x8xf32>
    %62 = vector.shape_cast %59 : vector<2x8xf32> to vector<1x2x8xf32>
    tpu.vector_store %arg4[%c0_30, %c0_31, %c32], %62 {strides = array<i32>} : memref<2x2x128xf32, #tpu.memory_space<vmem>>, vector<1x2x8xf32>,
    %63 = vector.extract_strided_slice %8 {offsets = [4, 0, 0], sizes = [1, 2, 8], strides = [1, 1, 1]} : vector<16x2x8xf32> to vector<1x2x8xf32>
    %64 = vector.shape_cast %63 : vector<1x2x8xf32> to vector<2x8xf32>
    %c1_32 = arith.constant 1 : index
    %c0_33 = arith.constant 0 : index
    %c32_34 = arith.constant 32 : index
    %65 = vector.load %arg4[%c1_32, %c0_33, %c32_34] : memref<2x2x128xf32, #tpu.memory_space<vmem>>, vector<1x2x8xf32>
    %66 = vector.shape_cast %65 : vector<1x2x8xf32> to vector<2x8xf32>
    %67 = vector.shape_cast %64 : vector<2x8xf32> to vector<1x2x8xf32>
    tpu.vector_store %arg4[%c1_32, %c0_33, %c32_34], %67 {strides = array<i32>} : memref<2x2x128xf32, #tpu.memory_space<vmem>>, vector<1x2x8xf32>,
    %68 = vector.extract_strided_slice %17 {offsets = [5, 0, 0], sizes = [1, 2, 8], strides = [1, 1, 1]} : vector<16x2x8xf32> to vector<1x2x8xf32>
    %69 = vector.shape_cast %68 : vector<1x2x8xf32> to vector<2x8xf32>
    %c0_35 = arith.constant 0 : index
    %c0_36 = arith.constant 0 : index
    %c40 = arith.constant 40 : index
    %70 = vector.load %arg4[%c0_35, %c0_36, %c40] : memref<2x2x128xf32, #tpu.memory_space<vmem>>, vector<1x2x8xf32>
    %71 = vector.shape_cast %70 : vector<1x2x8xf32> to vector<2x8xf32>
    %72 = vector.shape_cast %69 : vector<2x8xf32> to vector<1x2x8xf32>
    tpu.vector_store %arg4[%c0_35, %c0_36, %c40], %72 {strides = array<i32>} : memref<2x2x128xf32, #tpu.memory_space<vmem>>, vector<1x2x8xf32>,
    %73 = vector.extract_strided_slice %8 {offsets = [5, 0, 0], sizes = [1, 2, 8], strides = [1, 1, 1]} : vector<16x2x8xf32> to vector<1x2x8xf32>
    %74 = vector.shape_cast %73 : vector<1x2x8xf32> to vector<2x8xf32>
    %c1_37 = arith.constant 1 : index
    %c0_38 = arith.constant 0 : index
    %c40_39 = arith.constant 40 : index
    %75 = vector.load %arg4[%c1_37, %c0_38, %c40_39] : memref<2x2x128xf32, #tpu.memory_space<vmem>>, vector<1x2x8xf32>
    %76 = vector.shape_cast %75 : vector<1x2x8xf32> to vector<2x8xf32>
    %77 = vector.shape_cast %74 : vector<2x8xf32> to vector<1x2x8xf32>
    tpu.vector_store %arg4[%c1_37, %c0_38, %c40_39], %77 {strides = array<i32>} : memref<2x2x128xf32, #tpu.memory_space<vmem>>, vector<1x2x8xf32>,
    %78 = vector.extract_strided_slice %17 {offsets = [6, 0, 0], sizes = [1, 2, 8], strides = [1, 1, 1]} : vector<16x2x8xf32> to vector<1x2x8xf32>
    %79 = vector.shape_cast %78 : vector<1x2x8xf32> to vector<2x8xf32>
    %c0_40 = arith.constant 0 : index
    %c0_41 = arith.constant 0 : index
    %c48 = arith.constant 48 : index
    %80 = vector.load %arg4[%c0_40, %c0_41, %c48] : memref<2x2x128xf32, #tpu.memory_space<vmem>>, vector<1x2x8xf32>
    %81 = vector.shape_cast %80 : vector<1x2x8xf32> to vector<2x8xf32>
    %82 = vector.shape_cast %79 : vector<2x8xf32> to vector<1x2x8xf32>
    tpu.vector_store %arg4[%c0_40, %c0_41, %c48], %82 {strides = array<i32>} : memref<2x2x128xf32, #tpu.memory_space<vmem>>, vector<1x2x8xf32>,
    %83 = vector.extract_strided_slice %8 {offsets = [6, 0, 0], sizes = [1, 2, 8], strides = [1, 1, 1]} : vector<16x2x8xf32> to vector<1x2x8xf32>
    %84 = vector.shape_cast %83 : vector<1x2x8xf32> to vector<2x8xf32>
    %c1_42 = arith.constant 1 : index
    %c0_43 = arith.constant 0 : index
    %c48_44 = arith.constant 48 : index
    %85 = vector.load %arg4[%c1_42, %c0_43, %c48_44] : memref<2x2x128xf32, #tpu.memory_space<vmem>>, vector<1x2x8xf32>
    %86 = vector.shape_cast %85 : vector<1x2x8xf32> to vector<2x8xf32>
    %87 = vector.shape_cast %84 : vector<2x8xf32> to vector<1x2x8xf32>
    tpu.vector_store %arg4[%c1_42, %c0_43, %c48_44], %87 {strides = array<i32>} : memref<2x2x128xf32, #tpu.memory_space<vmem>>, vector<1x2x8xf32>,
    %88 = vector.extract_strided_slice %17 {offsets = [7, 0, 0], sizes = [1, 2, 8], strides = [1, 1, 1]} : vector<16x2x8xf32> to vector<1x2x8xf32>
    %89 = vector.shape_cast %88 : vector<1x2x8xf32> to vector<2x8xf32>
    %c0_45 = arith.constant 0 : index
    %c0_46 = arith.constant 0 : index
    %c56 = arith.constant 56 : index
    %90 = vector.load %arg4[%c0_45, %c0_46, %c56] : memref<2x2x128xf32, #tpu.memory_space<vmem>>, vector<1x2x8xf32>
    %91 = vector.shape_cast %90 : vector<1x2x8xf32> to vector<2x8xf32>
    %92 = vector.shape_cast %89 : vector<2x8xf32> to vector<1x2x8xf32>
    tpu.vector_store %arg4[%c0_45, %c0_46, %c56], %92 {strides = array<i32>} : memref<2x2x128xf32, #tpu.memory_space<vmem>>, vector<1x2x8xf32>,
    %93 = vector.extract_strided_slice %8 {offsets = [7, 0, 0], sizes = [1, 2, 8], strides = [1, 1, 1]} : vector<16x2x8xf32> to vector<1x2x8xf32>
    %94 = vector.shape_cast %93 : vector<1x2x8xf32> to vector<2x8xf32>
    %c1_47 = arith.constant 1 : index
    %c0_48 = arith.constant 0 : index
    %c56_49 = arith.constant 56 : index
    %95 = vector.load %arg4[%c1_47, %c0_48, %c56_49] : memref<2x2x128xf32, #tpu.memory_space<vmem>>, vector<1x2x8xf32>
    %96 = vector.shape_cast %95 : vector<1x2x8xf32> to vector<2x8xf32>
    %97 = vector.shape_cast %94 : vector<2x8xf32> to vector<1x2x8xf32>
    tpu.vector_store %arg4[%c1_47, %c0_48, %c56_49], %97 {strides = array<i32>} : memref<2x2x128xf32, #tpu.memory_space<vmem>>, vector<1x2x8xf32>,
    %98 = vector.extract_strided_slice %17 {offsets = [8, 0, 0], sizes = [1, 2, 8], strides = [1, 1, 1]} : vector<16x2x8xf32> to vector<1x2x8xf32>
    %99 = vector.shape_cast %98 : vector<1x2x8xf32> to vector<2x8xf32>
    %c0_50 = arith.constant 0 : index
    %c0_51 = arith.constant 0 : index
    %c64 = arith.constant 64 : index
    %100 = vector.load %arg4[%c0_50, %c0_51, %c64] : memref<2x2x128xf32, #tpu.memory_space<vmem>>, vector<1x2x8xf32>
    %101 = vector.shape_cast %100 : vector<1x2x8xf32> to vector<2x8xf32>
    %102 = vector.shape_cast %99 : vector<2x8xf32> to vector<1x2x8xf32>
    tpu.vector_store %arg4[%c0_50, %c0_51, %c64], %102 {strides = array<i32>} : memref<2x2x128xf32, #tpu.memory_space<vmem>>, vector<1x2x8xf32>,
    %103 = vector.extract_strided_slice %8 {offsets = [8, 0, 0], sizes = [1, 2, 8], strides = [1, 1, 1]} : vector<16x2x8xf32> to vector<1x2x8xf32>
    %104 = vector.shape_cast %103 : vector<1x2x8xf32> to vector<2x8xf32>
    %c1_52 = arith.constant 1 : index
    %c0_53 = arith.constant 0 : index
    %c64_54 = arith.constant 64 : index
    %105 = vector.load %arg4[%c1_52, %c0_53, %c64_54] : memref<2x2x128xf32, #tpu.memory_space<vmem>>, vector<1x2x8xf32>
    %106 = vector.shape_cast %105 : vector<1x2x8xf32> to vector<2x8xf32>
    %107 = vector.shape_cast %104 : vector<2x8xf32> to vector<1x2x8xf32>
    tpu.vector_store %arg4[%c1_52, %c0_53, %c64_54], %107 {strides = array<i32>} : memref<2x2x128xf32, #tpu.memory_space<vmem>>, vector<1x2x8xf32>,
    %108 = vector.extract_strided_slice %17 {offsets = [9, 0, 0], sizes = [1, 2, 8], strides = [1, 1, 1]} : vector<16x2x8xf32> to vector<1x2x8xf32>
    %109 = vector.shape_cast %108 : vector<1x2x8xf32> to vector<2x8xf32>
    %c0_55 = arith.constant 0 : index
    %c0_56 = arith.constant 0 : index
    %c72 = arith.constant 72 : index
    %110 = vector.load %arg4[%c0_55, %c0_56, %c72] : memref<2x2x128xf32, #tpu.memory_space<vmem>>, vector<1x2x8xf32>
    %111 = vector.shape_cast %110 : vector<1x2x8xf32> to vector<2x8xf32>
    %112 = vector.shape_cast %109 : vector<2x8xf32> to vector<1x2x8xf32>
    tpu.vector_store %arg4[%c0_55, %c0_56, %c72], %112 {strides = array<i32>} : memref<2x2x128xf32, #tpu.memory_space<vmem>>, vector<1x2x8xf32>,
    %113 = vector.extract_strided_slice %8 {offsets = [9, 0, 0], sizes = [1, 2, 8], strides = [1, 1, 1]} : vector<16x2x8xf32> to vector<1x2x8xf32>
    %114 = vector.shape_cast %113 : vector<1x2x8xf32> to vector<2x8xf32>
    %c1_57 = arith.constant 1 : index
    %c0_58 = arith.constant 0 : index
    %c72_59 = arith.constant 72 : index
    %115 = vector.load %arg4[%c1_57, %c0_58, %c72_59] : memref<2x2x128xf32, #tpu.memory_space<vmem>>, vector<1x2x8xf32>
    %116 = vector.shape_cast %115 : vector<1x2x8xf32> to vector<2x8xf32>
    %117 = vector.shape_cast %114 : vector<2x8xf32> to vector<1x2x8xf32>
    tpu.vector_store %arg4[%c1_57, %c0_58, %c72_59], %117 {strides = array<i32>} : memref<2x2x128xf32, #tpu.memory_space<vmem>>, vector<1x2x8xf32>,
    %118 = vector.extract_strided_slice %17 {offsets = [10, 0, 0], sizes = [1, 2, 8], strides = [1, 1, 1]} : vector<16x2x8xf32> to vector<1x2x8xf32>
    %119 = vector.shape_cast %118 : vector<1x2x8xf32> to vector<2x8xf32>
    %c0_60 = arith.constant 0 : index
    %c0_61 = arith.constant 0 : index
    %c80 = arith.constant 80 : index
    %120 = vector.load %arg4[%c0_60, %c0_61, %c80] : memref<2x2x128xf32, #tpu.memory_space<vmem>>, vector<1x2x8xf32>
    %121 = vector.shape_cast %120 : vector<1x2x8xf32> to vector<2x8xf32>
    %122 = vector.shape_cast %119 : vector<2x8xf32> to vector<1x2x8xf32>
    tpu.vector_store %arg4[%c0_60, %c0_61, %c80], %122 {strides = array<i32>} : memref<2x2x128xf32, #tpu.memory_space<vmem>>, vector<1x2x8xf32>,
    %123 = vector.extract_strided_slice %8 {offsets = [10, 0, 0], sizes = [1, 2, 8], strides = [1, 1, 1]} : vector<16x2x8xf32> to vector<1x2x8xf32>
    %124 = vector.shape_cast %123 : vector<1x2x8xf32> to vector<2x8xf32>
    %c1_62 = arith.constant 1 : index
    %c0_63 = arith.constant 0 : index
    %c80_64 = arith.constant 80 : index
    %125 = vector.load %arg4[%c1_62, %c0_63, %c80_64] : memref<2x2x128xf32, #tpu.memory_space<vmem>>, vector<1x2x8xf32>
    %126 = vector.shape_cast %125 : vector<1x2x8xf32> to vector<2x8xf32>
    %127 = vector.shape_cast %124 : vector<2x8xf32> to vector<1x2x8xf32>
    tpu.vector_store %arg4[%c1_62, %c0_63, %c80_64], %127 {strides = array<i32>} : memref<2x2x128xf32, #tpu.memory_space<vmem>>, vector<1x2x8xf32>,
    %128 = vector.extract_strided_slice %17 {offsets = [11, 0, 0], sizes = [1, 2, 8], strides = [1, 1, 1]} : vector<16x2x8xf32> to vector<1x2x8xf32>
    %129 = vector.shape_cast %128 : vector<1x2x8xf32> to vector<2x8xf32>
    %c0_65 = arith.constant 0 : index
    %c0_66 = arith.constant 0 : index
    %c88 = arith.constant 88 : index
    %130 = vector.load %arg4[%c0_65, %c0_66, %c88] : memref<2x2x128xf32, #tpu.memory_space<vmem>>, vector<1x2x8xf32>
    %131 = vector.shape_cast %130 : vector<1x2x8xf32> to vector<2x8xf32>
    %132 = vector.shape_cast %129 : vector<2x8xf32> to vector<1x2x8xf32>
    tpu.vector_store %arg4[%c0_65, %c0_66, %c88], %132 {strides = array<i32>} : memref<2x2x128xf32, #tpu.memory_space<vmem>>, vector<1x2x8xf32>,
    %133 = vector.extract_strided_slice %8 {offsets = [11, 0, 0], sizes = [1, 2, 8], strides = [1, 1, 1]} : vector<16x2x8xf32> to vector<1x2x8xf32>
    %134 = vector.shape_cast %133 : vector<1x2x8xf32> to vector<2x8xf32>
    %c1_67 = arith.constant 1 : index
    %c0_68 = arith.constant 0 : index
    %c88_69 = arith.constant 88 : index
    %135 = vector.load %arg4[%c1_67, %c0_68, %c88_69] : memref<2x2x128xf32, #tpu.memory_space<vmem>>, vector<1x2x8xf32>
    %136 = vector.shape_cast %135 : vector<1x2x8xf32> to vector<2x8xf32>
    %137 = vector.shape_cast %134 : vector<2x8xf32> to vector<1x2x8xf32>
    tpu.vector_store %arg4[%c1_67, %c0_68, %c88_69], %137 {strides = array<i32>} : memref<2x2x128xf32, #tpu.memory_space<vmem>>, vector<1x2x8xf32>,
    %138 = vector.extract_strided_slice %17 {offsets = [12, 0, 0], sizes = [1, 2, 8], strides = [1, 1, 1]} : vector<16x2x8xf32> to vector<1x2x8xf32>
    %139 = vector.shape_cast %138 : vector<1x2x8xf32> to vector<2x8xf32>
    %c0_70 = arith.constant 0 : index
    %c0_71 = arith.constant 0 : index
    %c96 = arith.constant 96 : index
    %140 = vector.load %arg4[%c0_70, %c0_71, %c96] : memref<2x2x128xf32, #tpu.memory_space<vmem>>, vector<1x2x8xf32>
    %141 = vector.shape_cast %140 : vector<1x2x8xf32> to vector<2x8xf32>
    %142 = vector.shape_cast %139 : vector<2x8xf32> to vector<1x2x8xf32>
    tpu.vector_store %arg4[%c0_70, %c0_71, %c96], %142 {strides = array<i32>} : memref<2x2x128xf32, #tpu.memory_space<vmem>>, vector<1x2x8xf32>,
    %143 = vector.extract_strided_slice %8 {offsets = [12, 0, 0], sizes = [1, 2, 8], strides = [1, 1, 1]} : vector<16x2x8xf32> to vector<1x2x8xf32>
    %144 = vector.shape_cast %143 : vector<1x2x8xf32> to vector<2x8xf32>
    %c1_72 = arith.constant 1 : index
    %c0_73 = arith.constant 0 : index
    %c96_74 = arith.constant 96 : index
    %145 = vector.load %arg4[%c1_72, %c0_73, %c96_74] : memref<2x2x128xf32, #tpu.memory_space<vmem>>, vector<1x2x8xf32>
    %146 = vector.shape_cast %145 : vector<1x2x8xf32> to vector<2x8xf32>
    %147 = vector.shape_cast %144 : vector<2x8xf32> to vector<1x2x8xf32>
    tpu.vector_store %arg4[%c1_72, %c0_73, %c96_74], %147 {strides = array<i32>} : memref<2x2x128xf32, #tpu.memory_space<vmem>>, vector<1x2x8xf32>,
    %148 = vector.extract_strided_slice %17 {offsets = [13, 0, 0], sizes = [1, 2, 8], strides = [1, 1, 1]} : vector<16x2x8xf32> to vector<1x2x8xf32>
    %149 = vector.shape_cast %148 : vector<1x2x8xf32> to vector<2x8xf32>
    %c0_75 = arith.constant 0 : index
    %c0_76 = arith.constant 0 : index
    %c104 = arith.constant 104 : index
    %150 = vector.load %arg4[%c0_75, %c0_76, %c104] : memref<2x2x128xf32, #tpu.memory_space<vmem>>, vector<1x2x8xf32>
    %151 = vector.shape_cast %150 : vector<1x2x8xf32> to vector<2x8xf32>
    %152 = vector.shape_cast %149 : vector<2x8xf32> to vector<1x2x8xf32>
    tpu.vector_store %arg4[%c0_75, %c0_76, %c104], %152 {strides = array<i32>} : memref<2x2x128xf32, #tpu.memory_space<vmem>>, vector<1x2x8xf32>,
    %153 = vector.extract_strided_slice %8 {offsets = [13, 0, 0], sizes = [1, 2, 8], strides = [1, 1, 1]} : vector<16x2x8xf32> to vector<1x2x8xf32>
    %154 = vector.shape_cast %153 : vector<1x2x8xf32> to vector<2x8xf32>
    %c1_77 = arith.constant 1 : index
    %c0_78 = arith.constant 0 : index
    %c104_79 = arith.constant 104 : index
    %155 = vector.load %arg4[%c1_77, %c0_78, %c104_79] : memref<2x2x128xf32, #tpu.memory_space<vmem>>, vector<1x2x8xf32>
    %156 = vector.shape_cast %155 : vector<1x2x8xf32> to vector<2x8xf32>
    %157 = vector.shape_cast %154 : vector<2x8xf32> to vector<1x2x8xf32>
    tpu.vector_store %arg4[%c1_77, %c0_78, %c104_79], %157 {strides = array<i32>} : memref<2x2x128xf32, #tpu.memory_space<vmem>>, vector<1x2x8xf32>,
    %158 = vector.extract_strided_slice %17 {offsets = [14, 0, 0], sizes = [1, 2, 8], strides = [1, 1, 1]} : vector<16x2x8xf32> to vector<1x2x8xf32>
    %159 = vector.shape_cast %158 : vector<1x2x8xf32> to vector<2x8xf32>
    %c0_80 = arith.constant 0 : index
    %c0_81 = arith.constant 0 : index
    %c112 = arith.constant 112 : index
    %160 = vector.load %arg4[%c0_80, %c0_81, %c112] : memref<2x2x128xf32, #tpu.memory_space<vmem>>, vector<1x2x8xf32>
    %161 = vector.shape_cast %160 : vector<1x2x8xf32> to vector<2x8xf32>
    %162 = vector.shape_cast %159 : vector<2x8xf32> to vector<1x2x8xf32>
    tpu.vector_store %arg4[%c0_80, %c0_81, %c112], %162 {strides = array<i32>} : memref<2x2x128xf32, #tpu.memory_space<vmem>>, vector<1x2x8xf32>,
    %163 = vector.extract_strided_slice %8 {offsets = [14, 0, 0], sizes = [1, 2, 8], strides = [1, 1, 1]} : vector<16x2x8xf32> to vector<1x2x8xf32>
    %164 = vector.shape_cast %163 : vector<1x2x8xf32> to vector<2x8xf32>
    %c1_82 = arith.constant 1 : index
    %c0_83 = arith.constant 0 : index
    %c112_84 = arith.constant 112 : index
    %165 = vector.load %arg4[%c1_82, %c0_83, %c112_84] : memref<2x2x128xf32, #tpu.memory_space<vmem>>, vector<1x2x8xf32>
    %166 = vector.shape_cast %165 : vector<1x2x8xf32> to vector<2x8xf32>
    %167 = vector.shape_cast %164 : vector<2x8xf32> to vector<1x2x8xf32>
    tpu.vector_store %arg4[%c1_82, %c0_83, %c112_84], %167 {strides = array<i32>} : memref<2x2x128xf32, #tpu.memory_space<vmem>>, vector<1x2x8xf32>,
    %168 = vector.extract_strided_slice %17 {offsets = [15, 0, 0], sizes = [1, 2, 8], strides = [1, 1, 1]} : vector<16x2x8xf32> to vector<1x2x8xf32>
    %169 = vector.shape_cast %168 : vector<1x2x8xf32> to vector<2x8xf32>
    %c0_85 = arith.constant 0 : index
    %c0_86 = arith.constant 0 : index
    %c120 = arith.constant 120 : index
    %170 = vector.load %arg4[%c0_85, %c0_86, %c120] : memref<2x2x128xf32, #tpu.memory_space<vmem>>, vector<1x2x8xf32>
    %171 = vector.shape_cast %170 : vector<1x2x8xf32> to vector<2x8xf32>
    %172 = vector.shape_cast %169 : vector<2x8xf32> to vector<1x2x8xf32>
    tpu.vector_store %arg4[%c0_85, %c0_86, %c120], %172 {strides = array<i32>} : memref<2x2x128xf32, #tpu.memory_space<vmem>>, vector<1x2x8xf32>,
    %173 = vector.extract_strided_slice %8 {offsets = [15, 0, 0], sizes = [1, 2, 8], strides = [1, 1, 1]} : vector<16x2x8xf32> to vector<1x2x8xf32>
    %174 = vector.shape_cast %173 : vector<1x2x8xf32> to vector<2x8xf32>
    %c1_87 = arith.constant 1 : index
    %c0_88 = arith.constant 0 : index
    %c120_89 = arith.constant 120 : index
    %175 = vector.load %arg4[%c1_87, %c0_88, %c120_89] : memref<2x2x128xf32, #tpu.memory_space<vmem>>, vector<1x2x8xf32>
    %176 = vector.shape_cast %175 : vector<1x2x8xf32> to vector<2x8xf32>
    %177 = vector.shape_cast %174 : vector<2x8xf32> to vector<1x2x8xf32>
    tpu.vector_store %arg4[%c1_87, %c0_88, %c120_89], %177 {strides = array<i32>} : memref<2x2x128xf32, #tpu.memory_space<vmem>>, vector<1x2x8xf32>,
    return
  }
  func.func @transform_0(%arg0: i32) -> (i32, i32, i32) {
    %c0_i32 = arith.constant 0 : i32
    %c0_i32_0 = arith.constant 0 : i32
    %c0_i32_1 = arith.constant 0 : i32
    return %arg0, %c0_i32, %c0_i32_0 : i32, i32, i32
  }
  func.func @transform_1(%arg0: i32) -> (i32, i32, i32) {
    %c0_i32 = arith.constant 0 : i32
    %c0_i32_0 = arith.constant 0 : i32
    %c0_i32_1 = arith.constant 0 : i32
    return %arg0, %c0_i32, %c0_i32_0 : i32, i32, i32
  }
  func.func @transform_2(%arg0: i32) -> (i32, i32) {
    %c0_i32 = arith.constant 0 : i32
    %c0_i32_0 = arith.constant 0 : i32
    %c0_i32_1 = arith.constant 0 : i32
    return %c0_i32, %c0_i32_0 : i32, i32
  }
  func.func @transform_3(%arg0: i32) -> (i32, i32, i32) {
    %c0_i32 = arith.constant 0 : i32
    %c0_i32_0 = arith.constant 0 : i32
    %c0_i32_1 = arith.constant 0 : i32
    return %c0_i32, %c0_i32_0, %arg0 : i32, i32, i32
  }
}

</mosaic_0001>

<llo_original>
// kernel: tpu_custom_call.1
$region0: #{tpu_custom_call.1}
  #allocation0 [shape = 'u32[]', space=smem, size = 0x4, offset = 0x4, fixed_abs, tag = 'smem constant byte address 0x4 - core index']
  #allocation1 [shape = 'u32[144,128]{1,0:T(1,128)}', space=vmem, size = 0x12000, scoped, tag = 'internal scratch']
  %s0 = inlined_call_operand.hbm [shape: bf16[32,2,32], index: 0, kind: input, shape index: {}]
  %s1 = inlined_call_operand.hbm [shape: bf16[32,8,64], index: 1, kind: input, shape index: {}]
  %s2 = inlined_call_operand.hbm [shape: bf16[32,64], index: 2, kind: input, shape index: {}]
  %s3 = inlined_call_operand.hbm [shape: f32[2,2,256], index: 3, kind: output, shape index: {}]
  %s4 = sld [smem:[#allocation0]]
  $region57: #{tpu_custom_call.1} parent=0
    _
  %s6 = ssub.s32 1, %s4
  %s7 = scalar_select 0, %s6, %s4
  $region1: #{tpu_custom_call.1} parent=0
    #allocation2 [shape = 'u8[16384]{0}', space=vmem, size = 0x4000, scoped, tag = 'input window, operand 0']
    #allocation3 [shape = 's32[2]{0}', space=sflag, size = 0x8, scoped, tag = 'scoped memory for tpu_custom_call.1']
    #allocation4 [shape = 's32[2]{0}', space=sflag, size = 0x8, scoped, tag = 'scoped memory for tpu_custom_call.1']
    #allocation5 [shape = 'u8[65536]{0}', space=vmem, size = 0x10000, scoped, tag = 'input window, operand 1']
    #allocation6 [shape = 's32[2]{0}', space=sflag, size = 0x8, scoped, tag = 'scoped memory for tpu_custom_call.1']
    #allocation7 [shape = 'u8[8192]{0}', space=vmem, size = 0x2000, scoped, tag = 'input window, operand 2, single buffered']
    #allocation8 [shape = 'u8[4096]{0}', space=vmem, size = 0x1000, scoped, tag = 'output window, operand 0']
    %8 = vsyncpa [#allocation3], 0
    %s9 = scalar_lea.sflag [#allocation3], 1
    %10 = vsyncpa %s9, 0
    %11 = vsyncpa [#allocation6], 0
    %s12 = scalar_lea.sflag [#allocation6], 1
    %13 = vsyncpa %s12, 0
    %14 = vsyncpa [#allocation4], 0
    %s15 = scalar_lea.sflag [#allocation4], 1
    %16 = vsyncpa %s15, 0
    loop: start=0, step=1, limit=4
    $region2: #{tpu_custom_call.1} parent=1 // loop_pre_header
      _
    $region3: #{tpu_custom_call.1} parent=1 // loop_header
      %s18 = sphi 0, %s22
      %p19 = scmp.ge.s32.totalorder %s18, 4
      %s28 = sphi 0, %s30
      %s31 = sphi 0, %s28
      %s32 = sphi 0, %s31
      %s48 = sphi 0, %s32
      %s54 = sphi 0, %s56
      %s57 = sphi 0, %s54
      %s58 = sphi 0, %s57
      %s74 = sphi 0, %s58
      %s78 = sphi 0, %s78
      %s80 = sphi 0, %s78
      %s81 = sphi 0, %s80
      %s95 = sphi 0, %s81
      %s101 = sphi 0, %s103
      %s104 = sphi 0, %s101
      %s105 = sphi 0, %s104
      %s121 = sphi 0, %s105
    $region4: #{tpu_custom_call.1} parent=1 // loop_header_branch
      %21 = sbr.rel (%p19) target = $region8
    $region5: #{tpu_custom_call.1} parent=1 // loop_body
      %s23 = ssub.s32 %s18, 1
      %s24 = ssub.s32 %s18, 2
      %s25 = sadd.s32 %s18, 1
      %s26 = ssub.s32 %s18, %s25
      %p27 = scmp.eq.s32.totalorder %s26, 0
      %s29 = sadd.s32 %s28, 1
      %s30 = scalar_select %p27, %s28, %s29
      %p33 = pneg %p27
      %p34 = scmp.eq.s32.totalorder %s18, 1
      %p35 = por %p33, %p34
      %p36 = scmp.ne.s32.totalorder %s28, %s31
      %p37 = scmp.eq.s32.totalorder %s18, 0
      %p38 = por %p36, %p37
      %p39 = scmp.ne.s32.totalorder %s28, %s31
      %p40 = scmp.eq.s32.totalorder %s23, 1
      %p41 = por %p39, %p40
      %p42 = scmp.ne.s32.totalorder %s31, %s32
      %p43 = scmp.eq.s32.totalorder %s23, 0
      %p44 = por %p42, %p43
      %p45 = scmp.ne.s32.totalorder %s31, %s32
      %p46 = scmp.eq.s32.totalorder %s24, 1
      %p47 = por %p45, %p46
      %p49 = scmp.ne.s32.totalorder %s32, %s48
      %p50 = scmp.eq.s32.totalorder %s24, 0
      %p51 = por %p49, %p50
      %s52 = ssub.s32 %s18, %s25
      %p53 = scmp.eq.s32.totalorder %s52, 0
      %s55 = sadd.s32 %s54, 1
      %s56 = scalar_select %p53, %s54, %s55
      %p59 = pneg %p53
      %p60 = scmp.eq.s32.totalorder %s18, 1
      %p61 = por %p59, %p60
      %p62 = scmp.ne.s32.totalorder %s54, %s57
      %p63 = scmp.eq.s32.totalorder %s18, 0
      %p64 = por %p62, %p63
      %p65 = scmp.ne.s32.totalorder %s54, %s57
      %p66 = scmp.eq.s32.totalorder %s23, 1
      %p67 = por %p65, %p66
      %p68 = scmp.ne.s32.totalorder %s57, %s58
      %p69 = scmp.eq.s32.totalorder %s23, 0
      %p70 = por %p68, %p69
      %p71 = scmp.ne.s32.totalorder %s57, %s58
      %p72 = scmp.eq.s32.totalorder %s24, 1
      %p73 = por %p71, %p72
      %p75 = scmp.ne.s32.totalorder %s58, %s74
      %p76 = scmp.eq.s32.totalorder %s24, 0
      %p77 = por %p75, %p76
      %s79 = sadd.s32 %s78, 1
      %p82 = scmp.eq.s32.totalorder %s18, 1
      %p83 = scmp.ne.s32.totalorder %s78, %s80
      %p84 = scmp.eq.s32.totalorder %s18, 0
      %p85 = por %p83, %p84
      %p86 = scmp.ne.s32.totalorder %s78, %s80
      %p87 = scmp.eq.s32.totalorder %s23, 1
      %p88 = por %p86, %p87
      %p89 = scmp.ne.s32.totalorder %s80, %s81
      %p90 = scmp.eq.s32.totalorder %s23, 0
      %p91 = por %p89, %p90
      %p92 = scmp.ne.s32.totalorder %s80, %s81
      %p93 = scmp.eq.s32.totalorder %s24, 1
      %p94 = por %p92, %p93
      %p96 = scmp.ne.s32.totalorder %s81, %s95
      %p97 = scmp.eq.s32.totalorder %s24, 0
      %p98 = por %p96, %p97
      %s99 = ssub.s32 %s18, %s25
      %p100 = scmp.eq.s32.totalorder %s99, 0
      %s102 = sadd.s32 %s101, 1
      %s103 = scalar_select %p100, %s101, %s102
      %p106 = pneg %p100
      %p107 = scmp.eq.s32.totalorder %s18, 1
      %p108 = por %p106, %p107
      %p109 = scmp.ne.s32.totalorder %s101, %s104
      %p110 = scmp.eq.s32.totalorder %s18, 0
      %p111 = por %p109, %p110
      %p112 = scmp.ne.s32.totalorder %s101, %s104
      %p113 = scmp.eq.s32.totalorder %s23, 1
      %p114 = por %p112, %p113
      %p115 = scmp.ne.s32.totalorder %s104, %s105
      %p116 = scmp.eq.s32.totalorder %s23, 0
      %p117 = por %p115, %p116
      %p118 = scmp.ne.s32.totalorder %s104, %s105
      %p119 = scmp.eq.s32.totalorder %s24, 1
      %p120 = por %p118, %p119
      %p122 = scmp.ne.s32.totalorder %s105, %s121
      %p123 = scmp.eq.s32.totalorder %s24, 0
      %p124 = por %p122, %p123
      %p125 = scmp.le.s32.totalorder 1, %s18
      %p126 = scmp.lt.s32.totalorder %s18, 3
      %p127 = pnand %p125, %p126
      %p128 = pneg %p127
      // Predicated region
      $region9: #{tpu_custom_call.1} parent=5 // pred_check
        _
      $region10: #{tpu_custom_call.1} parent=5 // pred_check_branch
        %130 = sbr.rel (%p127) target = $region12
      $region11: #{tpu_custom_call.1} parent=5 // pred_region
        %s131 = ssub.s32 %s18, 1
        // Predicated region
        $region13: #{tpu_custom_call.1} parent=11 // pred_check
          %p132 = pneg %p91
        $region14: #{tpu_custom_call.1} parent=11 // pred_check_branch
          %134 = sbr.rel (%p132) target = $region16
        $region15: #{tpu_custom_call.1} parent=11 // pred_region
          %s136 = ssub.s32 256, 256
          %137 = vsyncadd [#allocation6], %s136
          %s138 = sshll.u32 [#allocation7], 4
          %s139 = int_to_ptr.vmem [resolvable:$true] %s138
          %144 = dma.hbm_to_vmem [thread:$0]  %s2, 256, %s139, [#allocation6], 64, 64, 4
        $region16: #{tpu_custom_call.1} parent=11 // pred_fallthru
          _
      $region12: #{tpu_custom_call.1} parent=5 // pred_fallthru
        _
      %p145 = scmp.lt.s32.totalorder %s18, 2
      // Predicated region
      $region17: #{tpu_custom_call.1} parent=5 // pred_check
        %p146 = pneg %p145
      $region18: #{tpu_custom_call.1} parent=5 // pred_check_branch
        %148 = sbr.rel (%p146) target = $region20
      $region19: #{tpu_custom_call.1} parent=5 // pred_region
        // Predicated region
        $region21: #{tpu_custom_call.1} parent=19 // pred_check
          %p149 = pneg %p38
        $region22: #{tpu_custom_call.1} parent=19 // pred_check_branch
          %151 = sbr.rel (%p149) target = $region24
        $region23: #{tpu_custom_call.1} parent=19 // pred_region
          %s152 = sand.u32 %s28, 1
          %s153 = scalar_lea.sflag [#allocation3], %s152
          %s154 = sand.u32 %s28, 1
          %s155 = smul.addr %s154, 16
          %s156 = scalar_lea.vmem [#allocation2], %s155
          %s157 = smul.u32 16, %s18
          %s159 = ssub.s32 256, 256
          %160 = vsyncadd %s153, %s159
          %s161 = smul.addr %s157, 16
          %s162 = scalar_lea.hbm %s0, %s161
          %s163 = sshll.u32 %s156, 4
          %s164 = int_to_ptr.vmem [resolvable:$true] %s163
          %169 = dma.hbm_to_vmem [thread:$0]  %s162, 256, %s164, %s153, 16, 16, 1
        $region24: #{tpu_custom_call.1} parent=19 // pred_fallthru
          _
        // Predicated region
        $region25: #{tpu_custom_call.1} parent=19 // pred_check
          %p170 = pneg %p64
        $region26: #{tpu_custom_call.1} parent=19 // pred_check_branch
          %172 = sbr.rel (%p170) target = $region28
        $region27: #{tpu_custom_call.1} parent=19 // pred_region
          %s173 = sand.u32 %s18, 1
          %s174 = scalar_lea.sflag [#allocation6], %s173
          %s175 = sand.u32 %s54, 1
          %s176 = smul.addr %s175, 64
          %s177 = scalar_lea.vmem [#allocation5], %s176
          %s178 = smul.u32 16, %s18
          %s180 = ssub.s32 1024, 1024
          %181 = vsyncadd %s174, %s180
          %s182 = smul.addr %s178, 64
          %s183 = scalar_lea.hbm %s1, %s182
          %s184 = sshll.u32 %s177, 4
          %s185 = int_to_ptr.vmem [resolvable:$true] %s184
          %190 = dma.hbm_to_vmem [thread:$0]  %s183, 1024, %s185, %s174, 64, 64, 4
        $region28: #{tpu_custom_call.1} parent=19 // pred_fallthru
          _
      $region20: #{tpu_custom_call.1} parent=5 // pred_fallthru
        _
      %p191 = scmp.le.s32.totalorder 1, %s18
      %p192 = scmp.lt.s32.totalorder %s18, 3
      %p193 = pnand %p191, %p192
      %p194 = pneg %p193
      // Predicated region
      $region29: #{tpu_custom_call.1} parent=5 // pred_check
        _
      $region30: #{tpu_custom_call.1} parent=5 // pred_check_branch
        %196 = sbr.rel (%p193) target = $region32
      $region31: #{tpu_custom_call.1} parent=5 // pred_region
        %s197 = ssub.s32 %s18, 1
        %s198 = sand.u32 %s31, 1
        %s199 = scalar_lea.sflag [#allocation3], %s198
        %s200 = sand.u32 %s31, 1
        %s201 = smul.addr %s200, 16
        %s202 = scalar_lea.vmem [#allocation2], %s201
        // Predicated region
        $region33: #{tpu_custom_call.1} parent=31 // pred_check
          %p203 = pneg %p44
        $region34: #{tpu_custom_call.1} parent=31 // pred_check_branch
          %205 = sbr.rel (%p203) target = $region36
        $region35: #{tpu_custom_call.1} parent=31 // pred_region
          %206 = dma.done %s199, 256
        $region36: #{tpu_custom_call.1} parent=31 // pred_fallthru
          _
        %s207 = sand.u32 %s23, 1
        %s208 = scalar_lea.sflag [#allocation6], %s207
        %s209 = sand.u32 %s57, 1
        %s210 = smul.addr %s209, 64
        %s211 = scalar_lea.vmem [#allocation5], %s210
        // Predicated region
        $region37: #{tpu_custom_call.1} parent=31 // pred_check
          %p212 = pneg %p70
        $region38: #{tpu_custom_call.1} parent=31 // pred_check_branch
          %214 = sbr.rel (%p212) target = $region40
        $region39: #{tpu_custom_call.1} parent=31 // pred_region
          %215 = dma.done %s208, 1024
        $region40: #{tpu_custom_call.1} parent=31 // pred_fallthru
          _
        // Predicated region
        $region41: #{tpu_custom_call.1} parent=31 // pred_check
          %p216 = pneg %p91
        $region42: #{tpu_custom_call.1} parent=31 // pred_check_branch
          %218 = sbr.rel (%p216) target = $region44
        $region43: #{tpu_custom_call.1} parent=31 // pred_region
          %219 = dma.done [#allocation6], 256
        $region44: #{tpu_custom_call.1} parent=31 // pred_fallthru
          _
        %s220 = sand.u32 %s31, 1
        %s221 = scalar_lea.sflag [#allocation3], %s220
        %s222 = sand.u32 %s31, 1
        %s223 = smul.addr %s222, 16
        %s224 = scalar_lea.vmem [#allocation2], %s223
        %p225 = pneg %p44
        %p226 = pneg %p41
        %s227 = sand.u32 %s23, 1
        %s228 = scalar_lea.sflag [#allocation6], %s227
        %s229 = sand.u32 %s57, 1
        %s230 = smul.addr %s229, 64
        %s231 = scalar_lea.vmem [#allocation5], %s230
        %p232 = pneg %p70
        %p233 = pneg %p67
        %p234 = pneg %p91
        %p235 = pneg %p88
        %p236 = pneg %p117
        %p237 = pneg %p114
        %s238 = sand.u32 %s104, 1
        %s239 = scalar_lea.sflag [#allocation4], %s238
        %s240 = sand.u32 %s104, 1
        %s241 = smul.addr %s240, 4
        %s242 = scalar_lea.vmem [#allocation8], %s241
        %s243 = smul.u32 16, %s23
        %s244 = smul.u32 16, %s23
        %v246 = vld [vmem:[%s202] sm:$0x1]
        %v247 = vld [vmem:[%s202 + $0x1] sm:$0x1]
        %v248 = vld [vmem:[%s202 + $0x2] sm:$0x1]
        %v249 = vld [vmem:[%s202 + $0x3] sm:$0x1]
        %v250 = vld [vmem:[%s202 + $0x4] sm:$0x1]
        %v251 = vld [vmem:[%s202 + $0x5] sm:$0x1]
        %v252 = vld [vmem:[%s202 + $0x6] sm:$0x1]
        %v253 = vld [vmem:[%s202 + $0x7] sm:$0x1]
        %v254 = vld [vmem:[%s202 + $0x8] sm:$0x1]
        %v255 = vld [vmem:[%s202 + $0x9] sm:$0x1]
        %v256 = vld [vmem:[%s202 + $0xa] sm:$0x1]
        %v257 = vld [vmem:[%s202 + $0xb] sm:$0x1]
        %v258 = vld [vmem:[%s202 + $0xc] sm:$0x1]
        %v259 = vld [vmem:[%s202 + $0xd] sm:$0x1]
        %v260 = vld [vmem:[%s202 + $0xe] sm:$0x1]
        %v261 = vld [vmem:[%s202 + $0xf] sm:$0x1]
        %v262 = vld [vmem:[%s211] sm:$0xf]
        %v263 = vld [vmem:[%s211 + $0x4] sm:$0xf]
        %v264 = vld [vmem:[%s211 + $0x8] sm:$0xf]
        %v265 = vld [vmem:[%s211 + $0xc] sm:$0xf]
        %v266 = vld [vmem:[%s211 + $0x10] sm:$0xf]
        %v267 = vld [vmem:[%s211 + $0x14] sm:$0xf]
        %v268 = vld [vmem:[%s211 + $0x18] sm:$0xf]
        %v269 = vld [vmem:[%s211 + $0x1c] sm:$0xf]
        %v270 = vld [vmem:[%s211 + $0x20] sm:$0xf]
        %v271 = vld [vmem:[%s211 + $0x24] sm:$0xf]
        %v272 = vld [vmem:[%s211 + $0x28] sm:$0xf]
        %v273 = vld [vmem:[%s211 + $0x2c] sm:$0xf]
        %v274 = vld [vmem:[%s211 + $0x30] sm:$0xf]
        %v275 = vld [vmem:[%s211 + $0x34] sm:$0xf]
        %v276 = vld [vmem:[%s211 + $0x38] sm:$0xf]
        %v277 = vld [vmem:[%s211 + $0x3c] sm:$0xf]
        %v278 = vld [vmem:[#allocation7] sm:$0xf]
        %v279 = vld [vmem:[#allocation7 + $0x4] sm:$0xf]
        %v280 = vld [vmem:[#allocation7 + $0x8] sm:$0xf]
        %v281 = vld [vmem:[#allocation7 + $0xc] sm:$0xf]
        %v286 = vunpack.c.l.b16 %v278
        %v287 = vunpack.c.l.b16 %v279
        %v288 = vunpack.c.l.b16 %v280
        %v289 = vunpack.c.l.b16 %v281
        %v290 = vpack.c.b16 %v287, %v286
        %v291 = vpack.c.b16 %v289, %v288
        %vm294 = vcmask 261120
        %v296 = vsel %vm294, %v246, 0
        %298 = vmatprep.subr.bf16.mxu0 0
        %299 = vmatpush1.bf16.msra.mxu0 %v290
        %300 = vmatprep.subr.bf16.mxu0 0
        %301 = vmatpush1.bf16.msra.mxu0 %v291
        %302 = vmatprep.subr.bf16.mxu0 0
        %303 = vmatpush1.bf16.msra.mxu0 0
        %304 = vmatprep.subr.bf16.mxu0 0
        %305 = vmatpush1.bf16.msra.mxu0 0
        %306 = vmatprep.subr.bf16.mxu0 0
        %307 = vmatpush1.bf16.msra.mxu0 0
        %308 = vmatprep.subr.bf16.mxu0 0
        %309 = vmatpush1.bf16.msra.mxu0 0
        %310 = vmatprep.subr.bf16.mxu0 0
        %311 = vmatpush1.bf16.msra.mxu0 0
        %312 = vmatprep.subr.bf16.mxu0 0
        %313 = vmatpush1.bf16.msra.mxu0 0
        %314 = vmatprep.subr.bf16.mxu0 0
        %315 = vmatpush1.bf16.msra.mxu0 0
        %316 = vmatprep.subr.bf16.mxu0 0
        %317 = vmatpush1.bf16.msra.mxu0 0
        %318 = vmatprep.subr.bf16.mxu0 0
        %319 = vmatpush1.bf16.msra.mxu0 0
        %320 = vmatprep.subr.bf16.mxu0 0
        %321 = vmatpush1.bf16.msra.mxu0 0
        %322 = vmatprep.subr.bf16.mxu0 0
        %323 = vmatpush1.bf16.msra.mxu0 0
        %324 = vmatprep.subr.bf16.mxu0 0
        %325 = vmatpush1.bf16.msra.mxu0 0
        %326 = vmatprep.subr.bf16.mxu0 0
        %327 = vmatpush1.bf16.msra.mxu0 0
        %328 = vmatprep.subr.bf16.mxu0 0
        %329 = vmatpush1.bf16.msra.mxu0 0
        %330 = vmatprep.mubr.bf16.mxu0 0
        %331 = vmatmul.mubr.bf16.gmra.mrb[0].mxu0 %v296
        %v332 = vpop.f32.mrb[0].mxu0
        %v333 = vadd.f32 0.0, %v332
        %v334 = vpop.f32.mrb[0].mxu0
        %v335 = vpop.f32.mrb[0].mxu0
        %v336 = vpop.f32.mrb[0].mxu0
        %337 = vdwg.mxu0
        %v339 = vsel %vm294, %v247, 0
        %341 = vmatprep.subr.bf16.mxu0 0
        %342 = vmatpush1.bf16.msra.mxu0 %v290
        %343 = vmatprep.subr.bf16.mxu0 0
        %344 = vmatpush1.bf16.msra.mxu0 %v291
        %345 = vmatprep.subr.bf16.mxu0 0
        %346 = vmatpush1.bf16.msra.mxu0 0
        %347 = vmatprep.subr.bf16.mxu0 0
        %348 = vmatpush1.bf16.msra.mxu0 0
        %349 = vmatprep.subr.bf16.mxu0 0
        %350 = vmatpush1.bf16.msra.mxu0 0
        %351 = vmatprep.subr.bf16.mxu0 0
        %352 = vmatpush1.bf16.msra.mxu0 0
        %353 = vmatprep.subr.bf16.mxu0 0
        %354 = vmatpush1.bf16.msra.mxu0 0
        %355 = vmatprep.subr.bf16.mxu0 0
        %356 = vmatpush1.bf16.msra.mxu0 0
        %357 = vmatprep.subr.bf16.mxu0 0
        %358 = vmatpush1.bf16.msra.mxu0 0
        %359 = vmatprep.subr.bf16.mxu0 0
        %360 = vmatpush1.bf16.msra.mxu0 0
        %361 = vmatprep.subr.bf16.mxu0 0
        %362 = vmatpush1.bf16.msra.mxu0 0
        %363 = vmatprep.subr.bf16.mxu0 0
        %364 = vmatpush1.bf16.msra.mxu0 0
        %365 = vmatprep.subr.bf16.mxu0 0
        %366 = vmatpush1.bf16.msra.mxu0 0
        %367 = vmatprep.subr.bf16.mxu0 0
        %368 = vmatpush1.bf16.msra.mxu0 0
        %369 = vmatprep.subr.bf16.mxu0 0
        %370 = vmatpush1.bf16.msra.mxu0 0
        %371 = vmatprep.subr.bf16.mxu0 0
        %372 = vmatpush1.bf16.msra.mxu0 0
        %373 = vmatprep.mubr.bf16.mxu0 0
        %374 = vmatmul.mubr.bf16.gmra.mrb[0].mxu0 %v339
        %v375 = vpop.f32.mrb[0].mxu0
        %v376 = vadd.f32 0.0, %v375
        %v377 = vpop.f32.mrb[0].mxu0
        %v378 = vpop.f32.mrb[0].mxu0
        %v379 = vpop.f32.mrb[0].mxu0
        %380 = vdwg.mxu0
        %v382 = vsel %vm294, %v248, 0
        %384 = vmatprep.subr.bf16.mxu0 0
        %385 = vmatpush1.bf16.msra.mxu0 %v290
        %386 = vmatprep.subr.bf16.mxu0 0
        %387 = vmatpush1.bf16.msra.mxu0 %v291
        %388 = vmatprep.subr.bf16.mxu0 0
        %389 = vmatpush1.bf16.msra.mxu0 0
        %390 = vmatprep.subr.bf16.mxu0 0
        %391 = vmatpush1.bf16.msra.mxu0 0
        %392 = vmatprep.subr.bf16.mxu0 0
        %393 = vmatpush1.bf16.msra.mxu0 0
        %394 = vmatprep.subr.bf16.mxu0 0
        %395 = vmatpush1.bf16.msra.mxu0 0
        %396 = vmatprep.subr.bf16.mxu0 0
        %397 = vmatpush1.bf16.msra.mxu0 0
        %398 = vmatprep.subr.bf16.mxu0 0
        %399 = vmatpush1.bf16.msra.mxu0 0
        %400 = vmatprep.subr.bf16.mxu0 0
        %401 = vmatpush1.bf16.msra.mxu0 0
        %402 = vmatprep.subr.bf16.mxu0 0
        %403 = vmatpush1.bf16.msra.mxu0 0
        %404 = vmatprep.subr.bf16.mxu0 0
        %405 = vmatpush1.bf16.msra.mxu0 0
        %406 = vmatprep.subr.bf16.mxu0 0
        %407 = vmatpush1.bf16.msra.mxu0 0
        %408 = vmatprep.subr.bf16.mxu0 0
        %409 = vmatpush1.bf16.msra.mxu0 0
        %410 = vmatprep.subr.bf16.mxu0 0
        %411 = vmatpush1.bf16.msra.mxu0 0
        %412 = vmatprep.subr.bf16.mxu0 0
        %413 = vmatpush1.bf16.msra.mxu0 0
        %414 = vmatprep.subr.bf16.mxu0 0
        %415 = vmatpush1.bf16.msra.mxu0 0
        %416 = vmatprep.mubr.bf16.mxu0 0
        %417 = vmatmul.mubr.bf16.gmra.mrb[0].mxu0 %v382
        %v418 = vpop.f32.mrb[0].mxu0
        %v419 = vadd.f32 0.0, %v418
        %v420 = vpop.f32.mrb[0].mxu0
        %v421 = vpop.f32.mrb[0].mxu0
        %v422 = vpop.f32.mrb[0].mxu0
        %423 = vdwg.mxu0
        %v425 = vsel %vm294, %v249, 0
        %427 = vmatprep.subr.bf16.mxu0 0
        %428 = vmatpush1.bf16.msra.mxu0 %v290
        %429 = vmatprep.subr.bf16.mxu0 0
        %430 = vmatpush1.bf16.msra.mxu0 %v291
        %431 = vmatprep.subr.bf16.mxu0 0
        %432 = vmatpush1.bf16.msra.mxu0 0
        %433 = vmatprep.subr.bf16.mxu0 0
        %434 = vmatpush1.bf16.msra.mxu0 0
        %435 = vmatprep.subr.bf16.mxu0 0
        %436 = vmatpush1.bf16.msra.mxu0 0
        %437 = vmatprep.subr.bf16.mxu0 0
        %438 = vmatpush1.bf16.msra.mxu0 0
        %439 = vmatprep.subr.bf16.mxu0 0
        %440 = vmatpush1.bf16.msra.mxu0 0
        %441 = vmatprep.subr.bf16.mxu0 0
        %442 = vmatpush1.bf16.msra.mxu0 0
        %443 = vmatprep.subr.bf16.mxu0 0
        %444 = vmatpush1.bf16.msra.mxu0 0
        %445 = vmatprep.subr.bf16.mxu0 0
        %446 = vmatpush1.bf16.msra.mxu0 0
        %447 = vmatprep.subr.bf16.mxu0 0
        %448 = vmatpush1.bf16.msra.mxu0 0
        %449 = vmatprep.subr.bf16.mxu0 0
        %450 = vmatpush1.bf16.msra.mxu0 0
        %451 = vmatprep.subr.bf16.mxu0 0
        %452 = vmatpush1.bf16.msra.mxu0 0
        %453 = vmatprep.subr.bf16.mxu0 0
        %454 = vmatpush1.bf16.msra.mxu0 0
        %455 = vmatprep.subr.bf16.mxu0 0
        %456 = vmatpush1.bf16.msra.mxu0 0
        %457 = vmatprep.subr.bf16.mxu0 0
        %458 = vmatpush1.bf16.msra.mxu0 0
        %459 = vmatprep.mubr.bf16.mxu0 0
        %460 = vmatmul.mubr.bf16.gmra.mrb[0].mxu0 %v425
        %v461 = vpop.f32.mrb[0].mxu0
        %v462 = vadd.f32 0.0, %v461
        %v463 = vpop.f32.mrb[0].mxu0
        %v464 = vpop.f32.mrb[0].mxu0
        %v465 = vpop.f32.mrb[0].mxu0
        %466 = vdwg.mxu0
        %v468 = vsel %vm294, %v250, 0
        %470 = vmatprep.subr.bf16.mxu0 0
        %471 = vmatpush1.bf16.msra.mxu0 %v290
        %472 = vmatprep.subr.bf16.mxu0 0
        %473 = vmatpush1.bf16.msra.mxu0 %v291
        %474 = vmatprep.subr.bf16.mxu0 0
        %475 = vmatpush1.bf16.msra.mxu0 0
        %476 = vmatprep.subr.bf16.mxu0 0
        %477 = vmatpush1.bf16.msra.mxu0 0
        %478 = vmatprep.subr.bf16.mxu0 0
        %479 = vmatpush1.bf16.msra.mxu0 0
        %480 = vmatprep.subr.bf16.mxu0 0
        %481 = vmatpush1.bf16.msra.mxu0 0
        %482 = vmatprep.subr.bf16.mxu0 0
        %483 = vmatpush1.bf16.msra.mxu0 0
        %484 = vmatprep.subr.bf16.mxu0 0
        %485 = vmatpush1.bf16.msra.mxu0 0
        %486 = vmatprep.subr.bf16.mxu0 0
        %487 = vmatpush1.bf16.msra.mxu0 0
        %488 = vmatprep.subr.bf16.mxu0 0
        %489 = vmatpush1.bf16.msra.mxu0 0
        %490 = vmatprep.subr.bf16.mxu0 0
        %491 = vmatpush1.bf16.msra.mxu0 0
        %492 = vmatprep.subr.bf16.mxu0 0
        %493 = vmatpush1.bf16.msra.mxu0 0
        %494 = vmatprep.subr.bf16.mxu0 0
        %495 = vmatpush1.bf16.msra.mxu0 0
        %496 = vmatprep.subr.bf16.mxu0 0
        %497 = vmatpush1.bf16.msra.mxu0 0
        %498 = vmatprep.subr.bf16.mxu0 0
        %499 = vmatpush1.bf16.msra.mxu0 0
        %500 = vmatprep.subr.bf16.mxu0 0
        %501 = vmatpush1.bf16.msra.mxu0 0
        %502 = vmatprep.mubr.bf16.mxu0 0
        %503 = vmatmul.mubr.bf16.gmra.mrb[0].mxu0 %v468
        %v504 = vpop.f32.mrb[0].mxu0
        %v505 = vadd.f32 0.0, %v504
        %v506 = vpop.f32.mrb[0].mxu0
        %v507 = vpop.f32.mrb[0].mxu0
        %v508 = vpop.f32.mrb[0].mxu0
        %509 = vdwg.mxu0
        %v511 = vsel %vm294, %v251, 0
        %513 = vmatprep.subr.bf16.mxu0 0
        %514 = vmatpush1.bf16.msra.mxu0 %v290
        %515 = vmatprep.subr.bf16.mxu0 0
        %516 = vmatpush1.bf16.msra.mxu0 %v291
        %517 = vmatprep.subr.bf16.mxu0 0
        %518 = vmatpush1.bf16.msra.mxu0 0
        %519 = vmatprep.subr.bf16.mxu0 0
        %520 = vmatpush1.bf16.msra.mxu0 0
        %521 = vmatprep.subr.bf16.mxu0 0
        %522 = vmatpush1.bf16.msra.mxu0 0
        %523 = vmatprep.subr.bf16.mxu0 0
        %524 = vmatpush1.bf16.msra.mxu0 0
        %525 = vmatprep.subr.bf16.mxu0 0
        %526 = vmatpush1.bf16.msra.mxu0 0
        %527 = vmatprep.subr.bf16.mxu0 0
        %528 = vmatpush1.bf16.msra.mxu0 0
        %529 = vmatprep.subr.bf16.mxu0 0
        %530 = vmatpush1.bf16.msra.mxu0 0
        %531 = vmatprep.subr.bf16.mxu0 0
        %532 = vmatpush1.bf16.msra.mxu0 0
        %533 = vmatprep.subr.bf16.mxu0 0
        %534 = vmatpush1.bf16.msra.mxu0 0
        %535 = vmatprep.subr.bf16.mxu0 0
        %536 = vmatpush1.bf16.msra.mxu0 0
        %537 = vmatprep.subr.bf16.mxu0 0
        %538 = vmatpush1.bf16.msra.mxu0 0
        %539 = vmatprep.subr.bf16.mxu0 0
        %540 = vmatpush1.bf16.msra.mxu0 0
        %541 = vmatprep.subr.bf16.mxu0 0
        %542 = vmatpush1.bf16.msra.mxu0 0
        %543 = vmatprep.subr.bf16.mxu0 0
        %544 = vmatpush1.bf16.msra.mxu0 0
        %545 = vmatprep.mubr.bf16.mxu0 0
        %546 = vmatmul.mubr.bf16.gmra.mrb[0].mxu0 %v511
        %v547 = vpop.f32.mrb[0].mxu0
        %v548 = vadd.f32 0.0, %v547
        %v549 = vpop.f32.mrb[0].mxu0
        %v550 = vpop.f32.mrb[0].mxu0
        %v551 = vpop.f32.mrb[0].mxu0
        %552 = vdwg.mxu0
        %v554 = vsel %vm294, %v252, 0
        %556 = vmatprep.subr.bf16.mxu0 0
        %557 = vmatpush1.bf16.msra.mxu0 %v290
        %558 = vmatprep.subr.bf16.mxu0 0
        %559 = vmatpush1.bf16.msra.mxu0 %v291
        %560 = vmatprep.subr.bf16.mxu0 0
        %561 = vmatpush1.bf16.msra.mxu0 0
        %562 = vmatprep.subr.bf16.mxu0 0
        %563 = vmatpush1.bf16.msra.mxu0 0
        %564 = vmatprep.subr.bf16.mxu0 0
        %565 = vmatpush1.bf16.msra.mxu0 0
        %566 = vmatprep.subr.bf16.mxu0 0
        %567 = vmatpush1.bf16.msra.mxu0 0
        %568 = vmatprep.subr.bf16.mxu0 0
        %569 = vmatpush1.bf16.msra.mxu0 0
        %570 = vmatprep.subr.bf16.mxu0 0
        %571 = vmatpush1.bf16.msra.mxu0 0
        %572 = vmatprep.subr.bf16.mxu0 0
        %573 = vmatpush1.bf16.msra.mxu0 0
        %574 = vmatprep.subr.bf16.mxu0 0
        %575 = vmatpush1.bf16.msra.mxu0 0
        %576 = vmatprep.subr.bf16.mxu0 0
        %577 = vmatpush1.bf16.msra.mxu0 0
        %578 = vmatprep.subr.bf16.mxu0 0
        %579 = vmatpush1.bf16.msra.mxu0 0
        %580 = vmatprep.subr.bf16.mxu0 0
        %581 = vmatpush1.bf16.msra.mxu0 0
        %582 = vmatprep.subr.bf16.mxu0 0
        %583 = vmatpush1.bf16.msra.mxu0 0
        %584 = vmatprep.subr.bf16.mxu0 0
        %585 = vmatpush1.bf16.msra.mxu0 0
        %586 = vmatprep.subr.bf16.mxu0 0
        %587 = vmatpush1.bf16.msra.mxu0 0
        %588 = vmatprep.mubr.bf16.mxu0 0
        %589 = vmatmul.mubr.bf16.gmra.mrb[0].mxu0 %v554
        %v590 = vpop.f32.mrb[0].mxu0
        %v591 = vadd.f32 0.0, %v590
        %v592 = vpop.f32.mrb[0].mxu0
        %v593 = vpop.f32.mrb[0].mxu0
        %v594 = vpop.f32.mrb[0].mxu0
        %595 = vdwg.mxu0
        %v597 = vsel %vm294, %v253, 0
        %599 = vmatprep.subr.bf16.mxu0 0
        %600 = vmatpush1.bf16.msra.mxu0 %v290
        %601 = vmatprep.subr.bf16.mxu0 0
        %602 = vmatpush1.bf16.msra.mxu0 %v291
        %603 = vmatprep.subr.bf16.mxu0 0
        %604 = vmatpush1.bf16.msra.mxu0 0
        %605 = vmatprep.subr.bf16.mxu0 0
        %606 = vmatpush1.bf16.msra.mxu0 0
        %607 = vmatprep.subr.bf16.mxu0 0
        %608 = vmatpush1.bf16.msra.mxu0 0
        %609 = vmatprep.subr.bf16.mxu0 0
        %610 = vmatpush1.bf16.msra.mxu0 0
        %611 = vmatprep.subr.bf16.mxu0 0
        %612 = vmatpush1.bf16.msra.mxu0 0
        %613 = vmatprep.subr.bf16.mxu0 0
        %614 = vmatpush1.bf16.msra.mxu0 0
        %615 = vmatprep.subr.bf16.mxu0 0
        %616 = vmatpush1.bf16.msra.mxu0 0
        %617 = vmatprep.subr.bf16.mxu0 0
        %618 = vmatpush1.bf16.msra.mxu0 0
        %619 = vmatprep.subr.bf16.mxu0 0
        %620 = vmatpush1.bf16.msra.mxu0 0
        %621 = vmatprep.subr.bf16.mxu0 0
        %622 = vmatpush1.bf16.msra.mxu0 0
        %623 = vmatprep.subr.bf16.mxu0 0
        %624 = vmatpush1.bf16.msra.mxu0 0
        %625 = vmatprep.subr.bf16.mxu0 0
        %626 = vmatpush1.bf16.msra.mxu0 0
        %627 = vmatprep.subr.bf16.mxu0 0
        %628 = vmatpush1.bf16.msra.mxu0 0
        %629 = vmatprep.subr.bf16.mxu0 0
        %630 = vmatpush1.bf16.msra.mxu0 0
        %631 = vmatprep.mubr.bf16.mxu0 0
        %632 = vmatmul.mubr.bf16.gmra.mrb[0].mxu0 %v597
        %v633 = vpop.f32.mrb[0].mxu0
        %v634 = vadd.f32 0.0, %v633
        %v635 = vpop.f32.mrb[0].mxu0
        %v636 = vpop.f32.mrb[0].mxu0
        %v637 = vpop.f32.mrb[0].mxu0
        %638 = vdwg.mxu0
        %v640 = vsel %vm294, %v254, 0
        %642 = vmatprep.subr.bf16.mxu0 0
        %643 = vmatpush1.bf16.msra.mxu0 %v290
        %644 = vmatprep.subr.bf16.mxu0 0
        %645 = vmatpush1.bf16.msra.mxu0 %v291
        %646 = vmatprep.subr.bf16.mxu0 0
        %647 = vmatpush1.bf16.msra.mxu0 0
        %648 = vmatprep.subr.bf16.mxu0 0
        %649 = vmatpush1.bf16.msra.mxu0 0
        %650 = vmatprep.subr.bf16.mxu0 0
        %651 = vmatpush1.bf16.msra.mxu0 0
        %652 = vmatprep.subr.bf16.mxu0 0
        %653 = vmatpush1.bf16.msra.mxu0 0
        %654 = vmatprep.subr.bf16.mxu0 0
        %655 = vmatpush1.bf16.msra.mxu0 0
        %656 = vmatprep.subr.bf16.mxu0 0
        %657 = vmatpush1.bf16.msra.mxu0 0
        %658 = vmatprep.subr.bf16.mxu0 0
        %659 = vmatpush1.bf16.msra.mxu0 0
        %660 = vmatprep.subr.bf16.mxu0 0
        %661 = vmatpush1.bf16.msra.mxu0 0
        %662 = vmatprep.subr.bf16.mxu0 0
        %663 = vmatpush1.bf16.msra.mxu0 0
        %664 = vmatprep.subr.bf16.mxu0 0
        %665 = vmatpush1.bf16.msra.mxu0 0
        %666 = vmatprep.subr.bf16.mxu0 0
        %667 = vmatpush1.bf16.msra.mxu0 0
        %668 = vmatprep.subr.bf16.mxu0 0
        %669 = vmatpush1.bf16.msra.mxu0 0
        %670 = vmatprep.subr.bf16.mxu0 0
        %671 = vmatpush1.bf16.msra.mxu0 0
        %672 = vmatprep.subr.bf16.mxu0 0
        %673 = vmatpush1.bf16.msra.mxu0 0
        %674 = vmatprep.mubr.bf16.mxu0 0
        %675 = vmatmul.mubr.bf16.gmra.mrb[0].mxu0 %v640
        %v676 = vpop.f32.mrb[0].mxu0
        %v677 = vadd.f32 0.0, %v676
        %v678 = vpop.f32.mrb[0].mxu0
        %v679 = vpop.f32.mrb[0].mxu0
        %v680 = vpop.f32.mrb[0].mxu0
        %681 = vdwg.mxu0
        %v683 = vsel %vm294, %v255, 0
        %685 = vmatprep.subr.bf16.mxu0 0
        %686 = vmatpush1.bf16.msra.mxu0 %v290
        %687 = vmatprep.subr.bf16.mxu0 0
        %688 = vmatpush1.bf16.msra.mxu0 %v291
        %689 = vmatprep.subr.bf16.mxu0 0
        %690 = vmatpush1.bf16.msra.mxu0 0
        %691 = vmatprep.subr.bf16.mxu0 0
        %692 = vmatpush1.bf16.msra.mxu0 0
        %693 = vmatprep.subr.bf16.mxu0 0
        %694 = vmatpush1.bf16.msra.mxu0 0
        %695 = vmatprep.subr.bf16.mxu0 0
        %696 = vmatpush1.bf16.msra.mxu0 0
        %697 = vmatprep.subr.bf16.mxu0 0
        %698 = vmatpush1.bf16.msra.mxu0 0
        %699 = vmatprep.subr.bf16.mxu0 0
        %700 = vmatpush1.bf16.msra.mxu0 0
        %701 = vmatprep.subr.bf16.mxu0 0
        %702 = vmatpush1.bf16.msra.mxu0 0
        %703 = vmatprep.subr.bf16.mxu0 0
        %704 = vmatpush1.bf16.msra.mxu0 0
        %705 = vmatprep.subr.bf16.mxu0 0
        %706 = vmatpush1.bf16.msra.mxu0 0
        %707 = vmatprep.subr.bf16.mxu0 0
        %708 = vmatpush1.bf16.msra.mxu0 0
        %709 = vmatprep.subr.bf16.mxu0 0
        %710 = vmatpush1.bf16.msra.mxu0 0
        %711 = vmatprep.subr.bf16.mxu0 0
        %712 = vmatpush1.bf16.msra.mxu0 0
        %713 = vmatprep.subr.bf16.mxu0 0
        %714 = vmatpush1.bf16.msra.mxu0 0
        %715 = vmatprep.subr.bf16.mxu0 0
        %716 = vmatpush1.bf16.msra.mxu0 0
        %717 = vmatprep.mubr.bf16.mxu0 0
        %718 = vmatmul.mubr.bf16.gmra.mrb[0].mxu0 %v683
        %v719 = vpop.f32.mrb[0].mxu0
        %v720 = vadd.f32 0.0, %v719
        %v721 = vpop.f32.mrb[0].mxu0
        %v722 = vpop.f32.mrb[0].mxu0
        %v723 = vpop.f32.mrb[0].mxu0
        %724 = vdwg.mxu0
        %v726 = vsel %vm294, %v256, 0
        %728 = vmatprep.subr.bf16.mxu0 0
        %729 = vmatpush1.bf16.msra.mxu0 %v290
        %730 = vmatprep.subr.bf16.mxu0 0
        %731 = vmatpush1.bf16.msra.mxu0 %v291
        %732 = vmatprep.subr.bf16.mxu0 0
        %733 = vmatpush1.bf16.msra.mxu0 0
        %734 = vmatprep.subr.bf16.mxu0 0
        %735 = vmatpush1.bf16.msra.mxu0 0
        %736 = vmatprep.subr.bf16.mxu0 0
        %737 = vmatpush1.bf16.msra.mxu0 0
        %738 = vmatprep.subr.bf16.mxu0 0
        %739 = vmatpush1.bf16.msra.mxu0 0
        %740 = vmatprep.subr.bf16.mxu0 0
        %741 = vmatpush1.bf16.msra.mxu0 0
        %742 = vmatprep.subr.bf16.mxu0 0
        %743 = vmatpush1.bf16.msra.mxu0 0
        %744 = vmatprep.subr.bf16.mxu0 0
        %745 = vmatpush1.bf16.msra.mxu0 0
        %746 = vmatprep.subr.bf16.mxu0 0
        %747 = vmatpush1.bf16.msra.mxu0 0
        %748 = vmatprep.subr.bf16.mxu0 0
        %749 = vmatpush1.bf16.msra.mxu0 0
        %750 = vmatprep.subr.bf16.mxu0 0
        %751 = vmatpush1.bf16.msra.mxu0 0
        %752 = vmatprep.subr.bf16.mxu0 0
        %753 = vmatpush1.bf16.msra.mxu0 0
        %754 = vmatprep.subr.bf16.mxu0 0
        %755 = vmatpush1.bf16.msra.mxu0 0
        %756 = vmatprep.subr.bf16.mxu0 0
        %757 = vmatpush1.bf16.msra.mxu0 0
        %758 = vmatprep.subr.bf16.mxu0 0
        %759 = vmatpush1.bf16.msra.mxu0 0
        %760 = vmatprep.mubr.bf16.mxu0 0
        %761 = vmatmul.mubr.bf16.gmra.mrb[0].mxu0 %v726
        %v762 = vpop.f32.mrb[0].mxu0
        %v763 = vadd.f32 0.0, %v762
        %v764 = vpop.f32.mrb[0].mxu0
        %v765 = vpop.f32.mrb[0].mxu0
        %v766 = vpop.f32.mrb[0].mxu0
        %767 = vdwg.mxu0
        %v769 = vsel %vm294, %v257, 0
        %771 = vmatprep.subr.bf16.mxu0 0
        %772 = vmatpush1.bf16.msra.mxu0 %v290
        %773 = vmatprep.subr.bf16.mxu0 0
        %774 = vmatpush1.bf16.msra.mxu0 %v291
        %775 = vmatprep.subr.bf16.mxu0 0
        %776 = vmatpush1.bf16.msra.mxu0 0
        %777 = vmatprep.subr.bf16.mxu0 0
        %778 = vmatpush1.bf16.msra.mxu0 0
        %779 = vmatprep.subr.bf16.mxu0 0
        %780 = vmatpush1.bf16.msra.mxu0 0
        %781 = vmatprep.subr.bf16.mxu0 0
        %782 = vmatpush1.bf16.msra.mxu0 0
        %783 = vmatprep.subr.bf16.mxu0 0
        %784 = vmatpush1.bf16.msra.mxu0 0
        %785 = vmatprep.subr.bf16.mxu0 0
        %786 = vmatpush1.bf16.msra.mxu0 0
        %787 = vmatprep.subr.bf16.mxu0 0
        %788 = vmatpush1.bf16.msra.mxu0 0
        %789 = vmatprep.subr.bf16.mxu0 0
        %790 = vmatpush1.bf16.msra.mxu0 0
        %791 = vmatprep.subr.bf16.mxu0 0
        %792 = vmatpush1.bf16.msra.mxu0 0
        %793 = vmatprep.subr.bf16.mxu0 0
        %794 = vmatpush1.bf16.msra.mxu0 0
        %795 = vmatprep.subr.bf16.mxu0 0
        %796 = vmatpush1.bf16.msra.mxu0 0
        %797 = vmatprep.subr.bf16.mxu0 0
        %798 = vmatpush1.bf16.msra.mxu0 0
        %799 = vmatprep.subr.bf16.mxu0 0
        %800 = vmatpush1.bf16.msra.mxu0 0
        %801 = vmatprep.subr.bf16.mxu0 0
        %802 = vmatpush1.bf16.msra.mxu0 0
        %803 = vmatprep.mubr.bf16.mxu0 0
        %804 = vmatmul.mubr.bf16.gmra.mrb[0].mxu0 %v769
        %v805 = vpop.f32.mrb[0].mxu0
        %v806 = vadd.f32 0.0, %v805
        %v807 = vpop.f32.mrb[0].mxu0
        %v808 = vpop.f32.mrb[0].mxu0
        %v809 = vpop.f32.mrb[0].mxu0
        %810 = vdwg.mxu0
        %v812 = vsel %vm294, %v258, 0
        %814 = vmatprep.subr.bf16.mxu0 0
        %815 = vmatpush1.bf16.msra.mxu0 %v290
        %816 = vmatprep.subr.bf16.mxu0 0
        %817 = vmatpush1.bf16.msra.mxu0 %v291
        %818 = vmatprep.subr.bf16.mxu0 0
        %819 = vmatpush1.bf16.msra.mxu0 0
        %820 = vmatprep.subr.bf16.mxu0 0
        %821 = vmatpush1.bf16.msra.mxu0 0
        %822 = vmatprep.subr.bf16.mxu0 0
        %823 = vmatpush1.bf16.msra.mxu0 0
        %824 = vmatprep.subr.bf16.mxu0 0
        %825 = vmatpush1.bf16.msra.mxu0 0
        %826 = vmatprep.subr.bf16.mxu0 0
        %827 = vmatpush1.bf16.msra.mxu0 0
        %828 = vmatprep.subr.bf16.mxu0 0
        %829 = vmatpush1.bf16.msra.mxu0 0
        %830 = vmatprep.subr.bf16.mxu0 0
        %831 = vmatpush1.bf16.msra.mxu0 0
        %832 = vmatprep.subr.bf16.mxu0 0
        %833 = vmatpush1.bf16.msra.mxu0 0
        %834 = vmatprep.subr.bf16.mxu0 0
        %835 = vmatpush1.bf16.msra.mxu0 0
        %836 = vmatprep.subr.bf16.mxu0 0
        %837 = vmatpush1.bf16.msra.mxu0 0
        %838 = vmatprep.subr.bf16.mxu0 0
        %839 = vmatpush1.bf16.msra.mxu0 0
        %840 = vmatprep.subr.bf16.mxu0 0
        %841 = vmatpush1.bf16.msra.mxu0 0
        %842 = vmatprep.subr.bf16.mxu0 0
        %843 = vmatpush1.bf16.msra.mxu0 0
        %844 = vmatprep.subr.bf16.mxu0 0
        %845 = vmatpush1.bf16.msra.mxu0 0
        %846 = vmatprep.mubr.bf16.mxu0 0
        %847 = vmatmul.mubr.bf16.gmra.mrb[0].mxu0 %v812
        %v848 = vpop.f32.mrb[0].mxu0
        %v849 = vadd.f32 0.0, %v848
        %v850 = vpop.f32.mrb[0].mxu0
        %v851 = vpop.f32.mrb[0].mxu0
        %v852 = vpop.f32.mrb[0].mxu0
        %853 = vdwg.mxu0
        %v855 = vsel %vm294, %v259, 0
        %857 = vmatprep.subr.bf16.mxu0 0
        %858 = vmatpush1.bf16.msra.mxu0 %v290
        %859 = vmatprep.subr.bf16.mxu0 0
        %860 = vmatpush1.bf16.msra.mxu0 %v291
        %861 = vmatprep.subr.bf16.mxu0 0
        %862 = vmatpush1.bf16.msra.mxu0 0
        %863 = vmatprep.subr.bf16.mxu0 0
        %864 = vmatpush1.bf16.msra.mxu0 0
        %865 = vmatprep.subr.bf16.mxu0 0
        %866 = vmatpush1.bf16.msra.mxu0 0
        %867 = vmatprep.subr.bf16.mxu0 0
        %868 = vmatpush1.bf16.msra.mxu0 0
        %869 = vmatprep.subr.bf16.mxu0 0
        %870 = vmatpush1.bf16.msra.mxu0 0
        %871 = vmatprep.subr.bf16.mxu0 0
        %872 = vmatpush1.bf16.msra.mxu0 0
        %873 = vmatprep.subr.bf16.mxu0 0
        %874 = vmatpush1.bf16.msra.mxu0 0
        %875 = vmatprep.subr.bf16.mxu0 0
        %876 = vmatpush1.bf16.msra.mxu0 0
        %877 = vmatprep.subr.bf16.mxu0 0
        %878 = vmatpush1.bf16.msra.mxu0 0
        %879 = vmatprep.subr.bf16.mxu0 0
        %880 = vmatpush1.bf16.msra.mxu0 0
        %881 = vmatprep.subr.bf16.mxu0 0
        %882 = vmatpush1.bf16.msra.mxu0 0
        %883 = vmatprep.subr.bf16.mxu0 0
        %884 = vmatpush1.bf16.msra.mxu0 0
        %885 = vmatprep.subr.bf16.mxu0 0
        %886 = vmatpush1.bf16.msra.mxu0 0
        %887 = vmatprep.subr.bf16.mxu0 0
        %888 = vmatpush1.bf16.msra.mxu0 0
        %889 = vmatprep.mubr.bf16.mxu0 0
        %890 = vmatmul.mubr.bf16.gmra.mrb[0].mxu0 %v855
        %v891 = vpop.f32.mrb[0].mxu0
        %v892 = vadd.f32 0.0, %v891
        %v893 = vpop.f32.mrb[0].mxu0
        %v894 = vpop.f32.mrb[0].mxu0
        %v895 = vpop.f32.mrb[0].mxu0
        %896 = vdwg.mxu0
        %v898 = vsel %vm294, %v260, 0
        %900 = vmatprep.subr.bf16.mxu0 0
        %901 = vmatpush1.bf16.msra.mxu0 %v290
        %902 = vmatprep.subr.bf16.mxu0 0
        %903 = vmatpush1.bf16.msra.mxu0 %v291
        %904 = vmatprep.subr.bf16.mxu0 0
        %905 = vmatpush1.bf16.msra.mxu0 0
        %906 = vmatprep.subr.bf16.mxu0 0
        %907 = vmatpush1.bf16.msra.mxu0 0
        %908 = vmatprep.subr.bf16.mxu0 0
        %909 = vmatpush1.bf16.msra.mxu0 0
        %910 = vmatprep.subr.bf16.mxu0 0
        %911 = vmatpush1.bf16.msra.mxu0 0
        %912 = vmatprep.subr.bf16.mxu0 0
        %913 = vmatpush1.bf16.msra.mxu0 0
        %914 = vmatprep.subr.bf16.mxu0 0
        %915 = vmatpush1.bf16.msra.mxu0 0
        %916 = vmatprep.subr.bf16.mxu0 0
        %917 = vmatpush1.bf16.msra.mxu0 0
        %918 = vmatprep.subr.bf16.mxu0 0
        %919 = vmatpush1.bf16.msra.mxu0 0
        %920 = vmatprep.subr.bf16.mxu0 0
        %921 = vmatpush1.bf16.msra.mxu0 0
        %922 = vmatprep.subr.bf16.mxu0 0
        %923 = vmatpush1.bf16.msra.mxu0 0
        %924 = vmatprep.subr.bf16.mxu0 0
        %925 = vmatpush1.bf16.msra.mxu0 0
        %926 = vmatprep.subr.bf16.mxu0 0
        %927 = vmatpush1.bf16.msra.mxu0 0
        %928 = vmatprep.subr.bf16.mxu0 0
        %929 = vmatpush1.bf16.msra.mxu0 0
        %930 = vmatprep.subr.bf16.mxu0 0
        %931 = vmatpush1.bf16.msra.mxu0 0
        %932 = vmatprep.mubr.bf16.mxu0 0
        %933 = vmatmul.mubr.bf16.gmra.mrb[0].mxu0 %v898
        %v934 = vpop.f32.mrb[0].mxu0
        %v935 = vadd.f32 0.0, %v934
        %v936 = vpop.f32.mrb[0].mxu0
        %v937 = vpop.f32.mrb[0].mxu0
        %v938 = vpop.f32.mrb[0].mxu0
        %939 = vdwg.mxu0
        %v941 = vsel %vm294, %v261, 0
        %943 = vmatprep.subr.bf16.mxu0 0
        %944 = vmatpush1.bf16.msra.mxu0 %v290
        %945 = vmatprep.subr.bf16.mxu0 0
        %946 = vmatpush1.bf16.msra.mxu0 %v291
        %947 = vmatprep.subr.bf16.mxu0 0
        %948 = vmatpush1.bf16.msra.mxu0 0
        %949 = vmatprep.subr.bf16.mxu0 0
        %950 = vmatpush1.bf16.msra.mxu0 0
        %951 = vmatprep.subr.bf16.mxu0 0
        %952 = vmatpush1.bf16.msra.mxu0 0
        %953 = vmatprep.subr.bf16.mxu0 0
        %954 = vmatpush1.bf16.msra.mxu0 0
        %955 = vmatprep.subr.bf16.mxu0 0
        %956 = vmatpush1.bf16.msra.mxu0 0
        %957 = vmatprep.subr.bf16.mxu0 0
        %958 = vmatpush1.bf16.msra.mxu0 0
        %959 = vmatprep.subr.bf16.mxu0 0
        %960 = vmatpush1.bf16.msra.mxu0 0
        %961 = vmatprep.subr.bf16.mxu0 0
        %962 = vmatpush1.bf16.msra.mxu0 0
        %963 = vmatprep.subr.bf16.mxu0 0
        %964 = vmatpush1.bf16.msra.mxu0 0
        %965 = vmatprep.subr.bf16.mxu0 0
        %966 = vmatpush1.bf16.msra.mxu0 0
        %967 = vmatprep.subr.bf16.mxu0 0
        %968 = vmatpush1.bf16.msra.mxu0 0
        %969 = vmatprep.subr.bf16.mxu0 0
        %970 = vmatpush1.bf16.msra.mxu0 0
        %971 = vmatprep.subr.bf16.mxu0 0
        %972 = vmatpush1.bf16.msra.mxu0 0
        %973 = vmatprep.subr.bf16.mxu0 0
        %974 = vmatpush1.bf16.msra.mxu0 0
        %975 = vmatprep.mubr.bf16.mxu0 0
        %976 = vmatmul.mubr.bf16.gmra.mrb[0].mxu0 %v941
        %v977 = vpop.f32.mrb[0].mxu0
        %v978 = vadd.f32 0.0, %v977
        %v979 = vpop.f32.mrb[0].mxu0
        %v980 = vpop.f32.mrb[0].mxu0
        %v981 = vpop.f32.mrb[0].mxu0
        %982 = vdwg.mxu0
        %v983 = vpack.c.bf16 %v333, %v333
        %v984 = vpack.c.bf16 %v376, %v376
        %v985 = vpack.c.bf16 %v419, %v419
        %v986 = vpack.c.bf16 %v462, %v462
        %v987 = vpack.c.bf16 %v505, %v505
        %v988 = vpack.c.bf16 %v548, %v548
        %v989 = vpack.c.bf16 %v591, %v591
        %v990 = vpack.c.bf16 %v634, %v634
        %v991 = vpack.c.bf16 %v677, %v677
        %v992 = vpack.c.bf16 %v720, %v720
        %v993 = vpack.c.bf16 %v763, %v763
        %v994 = vpack.c.bf16 %v806, %v806
        %v995 = vpack.c.bf16 %v849, %v849
        %v996 = vpack.c.bf16 %v892, %v892
        %v997 = vpack.c.bf16 %v935, %v935
        %v998 = vpack.c.bf16 %v978, %v978
        %vm999 = vcmask 523264
        %v1001 = vsel %vm999, %v983, 0
        %v1004 = vsel %vm999, %v262, 0
        %1006 = vmatprep.subr.bf16.mxu0 0
        %1007 = vmatpush1.bf16.xpose.msra.mxu0 %v1004
        %1008 = vmatprep.subr.bf16.mxu0 0
        %1009 = vmatpush1.bf16.xpose.msra.mxu0 0
        %1010 = vmatprep.subr.bf16.mxu0 0
        %1011 = vmatpush1.bf16.xpose.msra.mxu0 0
        %1012 = vmatprep.subr.bf16.mxu0 0
        %1013 = vmatpush1.bf16.xpose.msra.mxu0 0
        %1014 = vmatprep.subr.bf16.mxu0 0
        %1015 = vmatpush1.bf16.xpose.msra.mxu0 0
        %1016 = vmatprep.subr.bf16.mxu0 0
        %1017 = vmatpush1.bf16.xpose.msra.mxu0 0
        %1018 = vmatprep.subr.bf16.mxu0 0
        %1019 = vmatpush1.bf16.xpose.msra.mxu0 0
        %1020 = vmatprep.subr.bf16.mxu0 0
        %1021 = vmatpush1.bf16.xpose.msra.mxu0 0
        %1022 = vmatprep.subr.bf16.mxu0 0
        %1023 = vmatpush1.bf16.xpose.msra.mxu0 0
        %1024 = vmatprep.subr.bf16.mxu0 0
        %1025 = vmatpush1.bf16.xpose.msra.mxu0 0
        %1026 = vmatprep.subr.bf16.mxu0 0
        %1027 = vmatpush1.bf16.xpose.msra.mxu0 0
        %1028 = vmatprep.subr.bf16.mxu0 0
        %1029 = vmatpush1.bf16.xpose.msra.mxu0 0
        %1030 = vmatprep.subr.bf16.mxu0 0
        %1031 = vmatpush1.bf16.xpose.msra.mxu0 0
        %1032 = vmatprep.subr.bf16.mxu0 0
        %1033 = vmatpush1.bf16.xpose.msra.mxu0 0
        %1034 = vmatprep.subr.bf16.mxu0 0
        %1035 = vmatpush1.bf16.xpose.msra.mxu0 0
        %1036 = vmatprep.subr.bf16.mxu0 0
        %1037 = vmatpush1.bf16.xpose.msra.mxu0 0
        %1038 = vmatprep.mubr.bf16.mxu0 0
        %1039 = vmatmul.mubr.bf16.gmra.mrb[0].mxu0 %v1001
        %v1040 = vpop.f32.mrb[0].mxu0
        %v1041 = vadd.f32 0.0, %v1040
        %v1042 = vpop.f32.mrb[0].mxu0
        %v1043 = vpop.f32.mrb[0].mxu0
        %v1044 = vpop.f32.mrb[0].mxu0
        %1045 = vdwg.mxu0
        %v1047 = vsel %vm999, %v984, 0
        %v1050 = vsel %vm999, %v263, 0
        %1052 = vmatprep.subr.bf16.mxu0 0
        %1053 = vmatpush1.bf16.xpose.msra.mxu0 %v1050
        %1054 = vmatprep.subr.bf16.mxu0 0
        %1055 = vmatpush1.bf16.xpose.msra.mxu0 0
        %1056 = vmatprep.subr.bf16.mxu0 0
        %1057 = vmatpush1.bf16.xpose.msra.mxu0 0
        %1058 = vmatprep.subr.bf16.mxu0 0
        %1059 = vmatpush1.bf16.xpose.msra.mxu0 0
        %1060 = vmatprep.subr.bf16.mxu0 0
        %1061 = vmatpush1.bf16.xpose.msra.mxu0 0
        %1062 = vmatprep.subr.bf16.mxu0 0
        %1063 = vmatpush1.bf16.xpose.msra.mxu0 0
        %1064 = vmatprep.subr.bf16.mxu0 0
        %1065 = vmatpush1.bf16.xpose.msra.mxu0 0
        %1066 = vmatprep.subr.bf16.mxu0 0
        %1067 = vmatpush1.bf16.xpose.msra.mxu0 0
        %1068 = vmatprep.subr.bf16.mxu0 0
        %1069 = vmatpush1.bf16.xpose.msra.mxu0 0
        %1070 = vmatprep.subr.bf16.mxu0 0
        %1071 = vmatpush1.bf16.xpose.msra.mxu0 0
        %1072 = vmatprep.subr.bf16.mxu0 0
        %1073 = vmatpush1.bf16.xpose.msra.mxu0 0
        %1074 = vmatprep.subr.bf16.mxu0 0
        %1075 = vmatpush1.bf16.xpose.msra.mxu0 0
        %1076 = vmatprep.subr.bf16.mxu0 0
        %1077 = vmatpush1.bf16.xpose.msra.mxu0 0
        %1078 = vmatprep.subr.bf16.mxu0 0
        %1079 = vmatpush1.bf16.xpose.msra.mxu0 0
        %1080 = vmatprep.subr.bf16.mxu0 0
        %1081 = vmatpush1.bf16.xpose.msra.mxu0 0
        %1082 = vmatprep.subr.bf16.mxu0 0
        %1083 = vmatpush1.bf16.xpose.msra.mxu0 0
        %1084 = vmatprep.mubr.bf16.mxu0 0
        %1085 = vmatmul.mubr.bf16.gmra.mrb[0].mxu0 %v1047
        %v1086 = vpop.f32.mrb[0].mxu0
        %v1087 = vadd.f32 0.0, %v1086
        %v1088 = vpop.f32.mrb[0].mxu0
        %v1089 = vpop.f32.mrb[0].mxu0
        %v1090 = vpop.f32.mrb[0].mxu0
        %1091 = vdwg.mxu0
        %v1093 = vsel %vm999, %v985, 0
        %v1096 = vsel %vm999, %v264, 0
        %1098 = vmatprep.subr.bf16.mxu0 0
        %1099 = vmatpush1.bf16.xpose.msra.mxu0 %v1096
        %1100 = vmatprep.subr.bf16.mxu0 0
        %1101 = vmatpush1.bf16.xpose.msra.mxu0 0
        %1102 = vmatprep.subr.bf16.mxu0 0
        %1103 = vmatpush1.bf16.xpose.msra.mxu0 0
        %1104 = vmatprep.subr.bf16.mxu0 0
        %1105 = vmatpush1.bf16.xpose.msra.mxu0 0
        %1106 = vmatprep.subr.bf16.mxu0 0
        %1107 = vmatpush1.bf16.xpose.msra.mxu0 0
        %1108 = vmatprep.subr.bf16.mxu0 0
        %1109 = vmatpush1.bf16.xpose.msra.mxu0 0
        %1110 = vmatprep.subr.bf16.mxu0 0
        %1111 = vmatpush1.bf16.xpose.msra.mxu0 0
        %1112 = vmatprep.subr.bf16.mxu0 0
        %1113 = vmatpush1.bf16.xpose.msra.mxu0 0
        %1114 = vmatprep.subr.bf16.mxu0 0
        %1115 = vmatpush1.bf16.xpose.msra.mxu0 0
        %1116 = vmatprep.subr.bf16.mxu0 0
        %1117 = vmatpush1.bf16.xpose.msra.mxu0 0
        %1118 = vmatprep.subr.bf16.mxu0 0
        %1119 = vmatpush1.bf16.xpose.msra.mxu0 0
        %1120 = vmatprep.subr.bf16.mxu0 0
        %1121 = vmatpush1.bf16.xpose.msra.mxu0 0
        %1122 = vmatprep.subr.bf16.mxu0 0
        %1123 = vmatpush1.bf16.xpose.msra.mxu0 0
        %1124 = vmatprep.subr.bf16.mxu0 0
        %1125 = vmatpush1.bf16.xpose.msra.mxu0 0
        %1126 = vmatprep.subr.bf16.mxu0 0
        %1127 = vmatpush1.bf16.xpose.msra.mxu0 0
        %1128 = vmatprep.subr.bf16.mxu0 0
        %1129 = vmatpush1.bf16.xpose.msra.mxu0 0
        %1130 = vmatprep.mubr.bf16.mxu0 0
        %1131 = vmatmul.mubr.bf16.gmra.mrb[0].mxu0 %v1093
        %v1132 = vpop.f32.mrb[0].mxu0
        %v1133 = vadd.f32 0.0, %v1132
        %v1134 = vpop.f32.mrb[0].mxu0
        %v1135 = vpop.f32.mrb[0].mxu0
        %v1136 = vpop.f32.mrb[0].mxu0
        %1137 = vdwg.mxu0
        %v1139 = vsel %vm999, %v986, 0
        %v1142 = vsel %vm999, %v265, 0
        %1144 = vmatprep.subr.bf16.mxu0 0
        %1145 = vmatpush1.bf16.xpose.msra.mxu0 %v1142
        %1146 = vmatprep.subr.bf16.mxu0 0
        %1147 = vmatpush1.bf16.xpose.msra.mxu0 0
        %1148 = vmatprep.subr.bf16.mxu0 0
        %1149 = vmatpush1.bf16.xpose.msra.mxu0 0
        %1150 = vmatprep.subr.bf16.mxu0 0
        %1151 = vmatpush1.bf16.xpose.msra.mxu0 0
        %1152 = vmatprep.subr.bf16.mxu0 0
        %1153 = vmatpush1.bf16.xpose.msra.mxu0 0
        %1154 = vmatprep.subr.bf16.mxu0 0
        %1155 = vmatpush1.bf16.xpose.msra.mxu0 0
        %1156 = vmatprep.subr.bf16.mxu0 0
        %1157 = vmatpush1.bf16.xpose.msra.mxu0 0
        %1158 = vmatprep.subr.bf16.mxu0 0
        %1159 = vmatpush1.bf16.xpose.msra.mxu0 0
        %1160 = vmatprep.subr.bf16.mxu0 0
        %1161 = vmatpush1.bf16.xpose.msra.mxu0 0
        %1162 = vmatprep.subr.bf16.mxu0 0
        %1163 = vmatpush1.bf16.xpose.msra.mxu0 0
        %1164 = vmatprep.subr.bf16.mxu0 0
        %1165 = vmatpush1.bf16.xpose.msra.mxu0 0
        %1166 = vmatprep.subr.bf16.mxu0 0
        %1167 = vmatpush1.bf16.xpose.msra.mxu0 0
        %1168 = vmatprep.subr.bf16.mxu0 0
        %1169 = vmatpush1.bf16.xpose.msra.mxu0 0
        %1170 = vmatprep.subr.bf16.mxu0 0
        %1171 = vmatpush1.bf16.xpose.msra.mxu0 0
        %1172 = vmatprep.subr.bf16.mxu0 0
        %1173 = vmatpush1.bf16.xpose.msra.mxu0 0
        %1174 = vmatprep.subr.bf16.mxu0 0
        %1175 = vmatpush1.bf16.xpose.msra.mxu0 0
        %1176 = vmatprep.mubr.bf16.mxu0 0
        %1177 = vmatmul.mubr.bf16.gmra.mrb[0].mxu0 %v1139
        %v1178 = vpop.f32.mrb[0].mxu0
        %v1179 = vadd.f32 0.0, %v1178
        %v1180 = vpop.f32.mrb[0].mxu0
        %v1181 = vpop.f32.mrb[0].mxu0
        %v1182 = vpop.f32.mrb[0].mxu0
        %1183 = vdwg.mxu0
        %v1185 = vsel %vm999, %v987, 0
        %v1188 = vsel %vm999, %v266, 0
        %1190 = vmatprep.subr.bf16.mxu0 0
        %1191 = vmatpush1.bf16.xpose.msra.mxu0 %v1188
        %1192 = vmatprep.subr.bf16.mxu0 0
        %1193 = vmatpush1.bf16.xpose.msra.mxu0 0
        %1194 = vmatprep.subr.bf16.mxu0 0
        %1195 = vmatpush1.bf16.xpose.msra.mxu0 0
        %1196 = vmatprep.subr.bf16.mxu0 0
        %1197 = vmatpush1.bf16.xpose.msra.mxu0 0
        %1198 = vmatprep.subr.bf16.mxu0 0
        %1199 = vmatpush1.bf16.xpose.msra.mxu0 0
        %1200 = vmatprep.subr.bf16.mxu0 0
        %1201 = vmatpush1.bf16.xpose.msra.mxu0 0
        %1202 = vmatprep.subr.bf16.mxu0 0
        %1203 = vmatpush1.bf16.xpose.msra.mxu0 0
        %1204 = vmatprep.subr.bf16.mxu0 0
        %1205 = vmatpush1.bf16.xpose.msra.mxu0 0
        %1206 = vmatprep.subr.bf16.mxu0 0
        %1207 = vmatpush1.bf16.xpose.msra.mxu0 0
        %1208 = vmatprep.subr.bf16.mxu0 0
        %1209 = vmatpush1.bf16.xpose.msra.mxu0 0
        %1210 = vmatprep.subr.bf16.mxu0 0
        %1211 = vmatpush1.bf16.xpose.msra.mxu0 0
        %1212 = vmatprep.subr.bf16.mxu0 0
        %1213 = vmatpush1.bf16.xpose.msra.mxu0 0
        %1214 = vmatprep.subr.bf16.mxu0 0
        %1215 = vmatpush1.bf16.xpose.msra.mxu0 0
        %1216 = vmatprep.subr.bf16.mxu0 0
        %1217 = vmatpush1.bf16.xpose.msra.mxu0 0
        %1218 = vmatprep.subr.bf16.mxu0 0
        %1219 = vmatpush1.bf16.xpose.msra.mxu0 0
        %1220 = vmatprep.subr.bf16.mxu0 0
        %1221 = vmatpush1.bf16.xpose.msra.mxu0 0
        %1222 = vmatprep.mubr.bf16.mxu0 0
        %1223 = vmatmul.mubr.bf16.gmra.mrb[0].mxu0 %v1185
        %v1224 = vpop.f32.mrb[0].mxu0
        %v1225 = vadd.f32 0.0, %v1224
        %v1226 = vpop.f32.mrb[0].mxu0
        %v1227 = vpop.f32.mrb[0].mxu0
        %v1228 = vpop.f32.mrb[0].mxu0
        %1229 = vdwg.mxu0
        %v1231 = vsel %vm999, %v988, 0
        %v1234 = vsel %vm999, %v267, 0
        %1236 = vmatprep.subr.bf16.mxu0 0
        %1237 = vmatpush1.bf16.xpose.msra.mxu0 %v1234
        %1238 = vmatprep.subr.bf16.mxu0 0
        %1239 = vmatpush1.bf16.xpose.msra.mxu0 0
        %1240 = vmatprep.subr.bf16.mxu0 0
        %1241 = vmatpush1.bf16.xpose.msra.mxu0 0
        %1242 = vmatprep.subr.bf16.mxu0 0
        %1243 = vmatpush1.bf16.xpose.msra.mxu0 0
        %1244 = vmatprep.subr.bf16.mxu0 0
        %1245 = vmatpush1.bf16.xpose.msra.mxu0 0
        %1246 = vmatprep.subr.bf16.mxu0 0
        %1247 = vmatpush1.bf16.xpose.msra.mxu0 0
        %1248 = vmatprep.subr.bf16.mxu0 0
        %1249 = vmatpush1.bf16.xpose.msra.mxu0 0
        %1250 = vmatprep.subr.bf16.mxu0 0
        %1251 = vmatpush1.bf16.xpose.msra.mxu0 0
        %1252 = vmatprep.subr.bf16.mxu0 0
        %1253 = vmatpush1.bf16.xpose.msra.mxu0 0
        %1254 = vmatprep.subr.bf16.mxu0 0
        %1255 = vmatpush1.bf16.xpose.msra.mxu0 0
        %1256 = vmatprep.subr.bf16.mxu0 0
        %1257 = vmatpush1.bf16.xpose.msra.mxu0 0
        %1258 = vmatprep.subr.bf16.mxu0 0
        %1259 = vmatpush1.bf16.xpose.msra.mxu0 0
        %1260 = vmatprep.subr.bf16.mxu0 0
        %1261 = vmatpush1.bf16.xpose.msra.mxu0 0
        %1262 = vmatprep.subr.bf16.mxu0 0
        %1263 = vmatpush1.bf16.xpose.msra.mxu0 0
        %1264 = vmatprep.subr.bf16.mxu0 0
        %1265 = vmatpush1.bf16.xpose.msra.mxu0 0
        %1266 = vmatprep.subr.bf16.mxu0 0
        %1267 = vmatpush1.bf16.xpose.msra.mxu0 0
        %1268 = vmatprep.mubr.bf16.mxu0 0
        %1269 = vmatmul.mubr.bf16.gmra.mrb[0].mxu0 %v1231
        %v1270 = vpop.f32.mrb[0].mxu0
        %v1271 = vadd.f32 0.0, %v1270
        %v1272 = vpop.f32.mrb[0].mxu0
        %v1273 = vpop.f32.mrb[0].mxu0
        %v1274 = vpop.f32.mrb[0].mxu0
        %1275 = vdwg.mxu0
        %v1277 = vsel %vm999, %v989, 0
        %v1280 = vsel %vm999, %v268, 0
        %1282 = vmatprep.subr.bf16.mxu0 0
        %1283 = vmatpush1.bf16.xpose.msra.mxu0 %v1280
        %1284 = vmatprep.subr.bf16.mxu0 0
        %1285 = vmatpush1.bf16.xpose.msra.mxu0 0
        %1286 = vmatprep.subr.bf16.mxu0 0
        %1287 = vmatpush1.bf16.xpose.msra.mxu0 0
        %1288 = vmatprep.subr.bf16.mxu0 0
        %1289 = vmatpush1.bf16.xpose.msra.mxu0 0
        %1290 = vmatprep.subr.bf16.mxu0 0
        %1291 = vmatpush1.bf16.xpose.msra.mxu0 0
        %1292 = vmatprep.subr.bf16.mxu0 0
        %1293 = vmatpush1.bf16.xpose.msra.mxu0 0
        %1294 = vmatprep.subr.bf16.mxu0 0
        %1295 = vmatpush1.bf16.xpose.msra.mxu0 0
        %1296 = vmatprep.subr.bf16.mxu0 0
        %1297 = vmatpush1.bf16.xpose.msra.mxu0 0
        %1298 = vmatprep.subr.bf16.mxu0 0
        %1299 = vmatpush1.bf16.xpose.msra.mxu0 0
        %1300 = vmatprep.subr.bf16.mxu0 0
        %1301 = vmatpush1.bf16.xpose.msra.mxu0 0
        %1302 = vmatprep.subr.bf16.mxu0 0
        %1303 = vmatpush1.bf16.xpose.msra.mxu0 0
        %1304 = vmatprep.subr.bf16.mxu0 0
        %1305 = vmatpush1.bf16.xpose.msra.mxu0 0
        %1306 = vmatprep.subr.bf16.mxu0 0
        %1307 = vmatpush1.bf16.xpose.msra.mxu0 0
        %1308 = vmatprep.subr.bf16.mxu0 0
        %1309 = vmatpush1.bf16.xpose.msra.mxu0 0
        %1310 = vmatprep.subr.bf16.mxu0 0
        %1311 = vmatpush1.bf16.xpose.msra.mxu0 0
        %1312 = vmatprep.subr.bf16.mxu0 0
        %1313 = vmatpush1.bf16.xpose.msra.mxu0 0
        %1314 = vmatprep.mubr.bf16.mxu0 0
        %1315 = vmatmul.mubr.bf16.gmra.mrb[0].mxu0 %v1277
        %v1316 = vpop.f32.mrb[0].mxu0
        %v1317 = vadd.f32 0.0, %v1316
        %v1318 = vpop.f32.mrb[0].mxu0
        %v1319 = vpop.f32.mrb[0].mxu0
        %v1320 = vpop.f32.mrb[0].mxu0
        %1321 = vdwg.mxu0
        %v1323 = vsel %vm999, %v990, 0
        %v1326 = vsel %vm999, %v269, 0
        %1328 = vmatprep.subr.bf16.mxu0 0
        %1329 = vmatpush1.bf16.xpose.msra.mxu0 %v1326
        %1330 = vmatprep.subr.bf16.mxu0 0
        %1331 = vmatpush1.bf16.xpose.msra.mxu0 0
        %1332 = vmatprep.subr.bf16.mxu0 0
        %1333 = vmatpush1.bf16.xpose.msra.mxu0 0
        %1334 = vmatprep.subr.bf16.mxu0 0
        %1335 = vmatpush1.bf16.xpose.msra.mxu0 0
        %1336 = vmatprep.subr.bf16.mxu0 0
        %1337 = vmatpush1.bf16.xpose.msra.mxu0 0
        %1338 = vmatprep.subr.bf16.mxu0 0
        %1339 = vmatpush1.bf16.xpose.msra.mxu0 0
        %1340 = vmatprep.subr.bf16.mxu0 0
        %1341 = vmatpush1.bf16.xpose.msra.mxu0 0
        %1342 = vmatprep.subr.bf16.mxu0 0
        %1343 = vmatpush1.bf16.xpose.msra.mxu0 0
        %1344 = vmatprep.subr.bf16.mxu0 0
        %1345 = vmatpush1.bf16.xpose.msra.mxu0 0
        %1346 = vmatprep.subr.bf16.mxu0 0
        %1347 = vmatpush1.bf16.xpose.msra.mxu0 0
        %1348 = vmatprep.subr.bf16.mxu0 0
        %1349 = vmatpush1.bf16.xpose.msra.mxu0 0
        %1350 = vmatprep.subr.bf16.mxu0 0
        %1351 = vmatpush1.bf16.xpose.msra.mxu0 0
        %1352 = vmatprep.subr.bf16.mxu0 0
        %1353 = vmatpush1.bf16.xpose.msra.mxu0 0
        %1354 = vmatprep.subr.bf16.mxu0 0
        %1355 = vmatpush1.bf16.xpose.msra.mxu0 0
        %1356 = vmatprep.subr.bf16.mxu0 0
        %1357 = vmatpush1.bf16.xpose.msra.mxu0 0
        %1358 = vmatprep.subr.bf16.mxu0 0
        %1359 = vmatpush1.bf16.xpose.msra.mxu0 0
        %1360 = vmatprep.mubr.bf16.mxu0 0
        %1361 = vmatmul.mubr.bf16.gmra.mrb[0].mxu0 %v1323
        %v1362 = vpop.f32.mrb[0].mxu0
        %v1363 = vadd.f32 0.0, %v1362
        %v1364 = vpop.f32.mrb[0].mxu0
        %v1365 = vpop.f32.mrb[0].mxu0
        %v1366 = vpop.f32.mrb[0].mxu0
        %1367 = vdwg.mxu0
        %v1369 = vsel %vm999, %v991, 0
        %v1372 = vsel %vm999, %v270, 0
        %1374 = vmatprep.subr.bf16.mxu0 0
        %1375 = vmatpush1.bf16.xpose.msra.mxu0 %v1372
        %1376 = vmatprep.subr.bf16.mxu0 0
        %1377 = vmatpush1.bf16.xpose.msra.mxu0 0
        %1378 = vmatprep.subr.bf16.mxu0 0
        %1379 = vmatpush1.bf16.xpose.msra.mxu0 0
        %1380 = vmatprep.subr.bf16.mxu0 0
        %1381 = vmatpush1.bf16.xpose.msra.mxu0 0
        %1382 = vmatprep.subr.bf16.mxu0 0
        %1383 = vmatpush1.bf16.xpose.msra.mxu0 0
        %1384 = vmatprep.subr.bf16.mxu0 0
        %1385 = vmatpush1.bf16.xpose.msra.mxu0 0
        %1386 = vmatprep.subr.bf16.mxu0 0
        %1387 = vmatpush1.bf16.xpose.msra.mxu0 0
        %1388 = vmatprep.subr.bf16.mxu0 0
        %1389 = vmatpush1.bf16.xpose.msra.mxu0 0
        %1390 = vmatprep.subr.bf16.mxu0 0
        %1391 = vmatpush1.bf16.xpose.msra.mxu0 0
        %1392 = vmatprep.subr.bf16.mxu0 0
        %1393 = vmatpush1.bf16.xpose.msra.mxu0 0
        %1394 = vmatprep.subr.bf16.mxu0 0
        %1395 = vmatpush1.bf16.xpose.msra.mxu0 0
        %1396 = vmatprep.subr.bf16.mxu0 0
        %1397 = vmatpush1.bf16.xpose.msra.mxu0 0
        %1398 = vmatprep.subr.bf16.mxu0 0
        %1399 = vmatpush1.bf16.xpose.msra.mxu0 0
        %1400 = vmatprep.subr.bf16.mxu0 0
        %1401 = vmatpush1.bf16.xpose.msra.mxu0 0
        %1402 = vmatprep.subr.bf16.mxu0 0
        %1403 = vmatpush1.bf16.xpose.msra.mxu0 0
        %1404 = vmatprep.subr.bf16.mxu0 0
        %1405 = vmatpush1.bf16.xpose.msra.mxu0 0
        %1406 = vmatprep.mubr.bf16.mxu0 0
        %1407 = vmatmul.mubr.bf16.gmra.mrb[0].mxu0 %v1369
        %v1408 = vpop.f32.mrb[0].mxu0
        %v1409 = vadd.f32 0.0, %v1408
        %v1410 = vpop.f32.mrb[0].mxu0
        %v1411 = vpop.f32.mrb[0].mxu0
        %v1412 = vpop.f32.mrb[0].mxu0
        %1413 = vdwg.mxu0
        %v1415 = vsel %vm999, %v992, 0
        %v1418 = vsel %vm999, %v271, 0
        %1420 = vmatprep.subr.bf16.mxu0 0
        %1421 = vmatpush1.bf16.xpose.msra.mxu0 %v1418
        %1422 = vmatprep.subr.bf16.mxu0 0
        %1423 = vmatpush1.bf16.xpose.msra.mxu0 0
        %1424 = vmatprep.subr.bf16.mxu0 0
        %1425 = vmatpush1.bf16.xpose.msra.mxu0 0
        %1426 = vmatprep.subr.bf16.mxu0 0
        %1427 = vmatpush1.bf16.xpose.msra.mxu0 0
        %1428 = vmatprep.subr.bf16.mxu0 0
        %1429 = vmatpush1.bf16.xpose.msra.mxu0 0
        %1430 = vmatprep.subr.bf16.mxu0 0
        %1431 = vmatpush1.bf16.xpose.msra.mxu0 0
        %1432 = vmatprep.subr.bf16.mxu0 0
        %1433 = vmatpush1.bf16.xpose.msra.mxu0 0
        %1434 = vmatprep.subr.bf16.mxu0 0
        %1435 = vmatpush1.bf16.xpose.msra.mxu0 0
        %1436 = vmatprep.subr.bf16.mxu0 0
        %1437 = vmatpush1.bf16.xpose.msra.mxu0 0
        %1438 = vmatprep.subr.bf16.mxu0 0
        %1439 = vmatpush1.bf16.xpose.msra.mxu0 0
        %1440 = vmatprep.subr.bf16.mxu0 0
        %1441 = vmatpush1.bf16.xpose.msra.mxu0 0
        %1442 = vmatprep.subr.bf16.mxu0 0
        %1443 = vmatpush1.bf16.xpose.msra.mxu0 0
        %1444 = vmatprep.subr.bf16.mxu0 0
        %1445 = vmatpush1.bf16.xpose.msra.mxu0 0
        %1446 = vmatprep.subr.bf16.mxu0 0
        %1447 = vmatpush1.bf16.xpose.msra.mxu0 0
        %1448 = vmatprep.subr.bf16.mxu0 0
        %1449 = vmatpush1.bf16.xpose.msra.mxu0 0
        %1450 = vmatprep.subr.bf16.mxu0 0
        %1451 = vmatpush1.bf16.xpose.msra.mxu0 0
        %1452 = vmatprep.mubr.bf16.mxu0 0
        %1453 = vmatmul.mubr.bf16.gmra.mrb[0].mxu0 %v1415
        %v1454 = vpop.f32.mrb[0].mxu0
        %v1455 = vadd.f32 0.0, %v1454
        %v1456 = vpop.f32.mrb[0].mxu0
        %v1457 = vpop.f32.mrb[0].mxu0
        %v1458 = vpop.f32.mrb[0].mxu0
        %1459 = vdwg.mxu0
        %v1461 = vsel %vm999, %v993, 0
        %v1464 = vsel %vm999, %v272, 0
        %1466 = vmatprep.subr.bf16.mxu0 0
        %1467 = vmatpush1.bf16.xpose.msra.mxu0 %v1464
        %1468 = vmatprep.subr.bf16.mxu0 0
        %1469 = vmatpush1.bf16.xpose.msra.mxu0 0
        %1470 = vmatprep.subr.bf16.mxu0 0
        %1471 = vmatpush1.bf16.xpose.msra.mxu0 0
        %1472 = vmatprep.subr.bf16.mxu0 0
        %1473 = vmatpush1.bf16.xpose.msra.mxu0 0
        %1474 = vmatprep.subr.bf16.mxu0 0
        %1475 = vmatpush1.bf16.xpose.msra.mxu0 0
        %1476 = vmatprep.subr.bf16.mxu0 0
        %1477 = vmatpush1.bf16.xpose.msra.mxu0 0
        %1478 = vmatprep.subr.bf16.mxu0 0
        %1479 = vmatpush1.bf16.xpose.msra.mxu0 0
        %1480 = vmatprep.subr.bf16.mxu0 0
        %1481 = vmatpush1.bf16.xpose.msra.mxu0 0
        %1482 = vmatprep.subr.bf16.mxu0 0
        %1483 = vmatpush1.bf16.xpose.msra.mxu0 0
        %1484 = vmatprep.subr.bf16.mxu0 0
        %1485 = vmatpush1.bf16.xpose.msra.mxu0 0
        %1486 = vmatprep.subr.bf16.mxu0 0
        %1487 = vmatpush1.bf16.xpose.msra.mxu0 0
        %1488 = vmatprep.subr.bf16.mxu0 0
        %1489 = vmatpush1.bf16.xpose.msra.mxu0 0
        %1490 = vmatprep.subr.bf16.mxu0 0
        %1491 = vmatpush1.bf16.xpose.msra.mxu0 0
        %1492 = vmatprep.subr.bf16.mxu0 0
        %1493 = vmatpush1.bf16.xpose.msra.mxu0 0
        %1494 = vmatprep.subr.bf16.mxu0 0
        %1495 = vmatpush1.bf16.xpose.msra.mxu0 0
        %1496 = vmatprep.subr.bf16.mxu0 0
        %1497 = vmatpush1.bf16.xpose.msra.mxu0 0
        %1498 = vmatprep.mubr.bf16.mxu0 0
        %1499 = vmatmul.mubr.bf16.gmra.mrb[0].mxu0 %v1461
        %v1500 = vpop.f32.mrb[0].mxu0
        %v1501 = vadd.f32 0.0, %v1500
        %v1502 = vpop.f32.mrb[0].mxu0
        %v1503 = vpop.f32.mrb[0].mxu0
        %v1504 = vpop.f32.mrb[0].mxu0
        %1505 = vdwg.mxu0
        %v1507 = vsel %vm999, %v994, 0
        %v1510 = vsel %vm999, %v273, 0
        %1512 = vmatprep.subr.bf16.mxu0 0
        %1513 = vmatpush1.bf16.xpose.msra.mxu0 %v1510
        %1514 = vmatprep.subr.bf16.mxu0 0
        %1515 = vmatpush1.bf16.xpose.msra.mxu0 0
        %1516 = vmatprep.subr.bf16.mxu0 0
        %1517 = vmatpush1.bf16.xpose.msra.mxu0 0
        %1518 = vmatprep.subr.bf16.mxu0 0
        %1519 = vmatpush1.bf16.xpose.msra.mxu0 0
        %1520 = vmatprep.subr.bf16.mxu0 0
        %1521 = vmatpush1.bf16.xpose.msra.mxu0 0
        %1522 = vmatprep.subr.bf16.mxu0 0
        %1523 = vmatpush1.bf16.xpose.msra.mxu0 0
        %1524 = vmatprep.subr.bf16.mxu0 0
        %1525 = vmatpush1.bf16.xpose.msra.mxu0 0
        %1526 = vmatprep.subr.bf16.mxu0 0
        %1527 = vmatpush1.bf16.xpose.msra.mxu0 0
        %1528 = vmatprep.subr.bf16.mxu0 0
        %1529 = vmatpush1.bf16.xpose.msra.mxu0 0
        %1530 = vmatprep.subr.bf16.mxu0 0
        %1531 = vmatpush1.bf16.xpose.msra.mxu0 0
        %1532 = vmatprep.subr.bf16.mxu0 0
        %1533 = vmatpush1.bf16.xpose.msra.mxu0 0
        %1534 = vmatprep.subr.bf16.mxu0 0
        %1535 = vmatpush1.bf16.xpose.msra.mxu0 0
        %1536 = vmatprep.subr.bf16.mxu0 0
        %1537 = vmatpush1.bf16.xpose.msra.mxu0 0
        %1538 = vmatprep.subr.bf16.mxu0 0
        %1539 = vmatpush1.bf16.xpose.msra.mxu0 0
        %1540 = vmatprep.subr.bf16.mxu0 0
        %1541 = vmatpush1.bf16.xpose.msra.mxu0 0
        %1542 = vmatprep.subr.bf16.mxu0 0
        %1543 = vmatpush1.bf16.xpose.msra.mxu0 0
        %1544 = vmatprep.mubr.bf16.mxu0 0
        %1545 = vmatmul.mubr.bf16.gmra.mrb[0].mxu0 %v1507
        %v1546 = vpop.f32.mrb[0].mxu0
        %v1547 = vadd.f32 0.0, %v1546
        %v1548 = vpop.f32.mrb[0].mxu0
        %v1549 = vpop.f32.mrb[0].mxu0
        %v1550 = vpop.f32.mrb[0].mxu0
        %1551 = vdwg.mxu0
        %v1553 = vsel %vm999, %v995, 0
        %v1556 = vsel %vm999, %v274, 0
        %1558 = vmatprep.subr.bf16.mxu0 0
        %1559 = vmatpush1.bf16.xpose.msra.mxu0 %v1556
        %1560 = vmatprep.subr.bf16.mxu0 0
        %1561 = vmatpush1.bf16.xpose.msra.mxu0 0
        %1562 = vmatprep.subr.bf16.mxu0 0
        %1563 = vmatpush1.bf16.xpose.msra.mxu0 0
        %1564 = vmatprep.subr.bf16.mxu0 0
        %1565 = vmatpush1.bf16.xpose.msra.mxu0 0
        %1566 = vmatprep.subr.bf16.mxu0 0
        %1567 = vmatpush1.bf16.xpose.msra.mxu0 0
        %1568 = vmatprep.subr.bf16.mxu0 0
        %1569 = vmatpush1.bf16.xpose.msra.mxu0 0
        %1570 = vmatprep.subr.bf16.mxu0 0
        %1571 = vmatpush1.bf16.xpose.msra.mxu0 0
        %1572 = vmatprep.subr.bf16.mxu0 0
        %1573 = vmatpush1.bf16.xpose.msra.mxu0 0
        %1574 = vmatprep.subr.bf16.mxu0 0
        %1575 = vmatpush1.bf16.xpose.msra.mxu0 0
        %1576 = vmatprep.subr.bf16.mxu0 0
        %1577 = vmatpush1.bf16.xpose.msra.mxu0 0
        %1578 = vmatprep.subr.bf16.mxu0 0
        %1579 = vmatpush1.bf16.xpose.msra.mxu0 0
        %1580 = vmatprep.subr.bf16.mxu0 0
        %1581 = vmatpush1.bf16.xpose.msra.mxu0 0
        %1582 = vmatprep.subr.bf16.mxu0 0
        %1583 = vmatpush1.bf16.xpose.msra.mxu0 0
        %1584 = vmatprep.subr.bf16.mxu0 0
        %1585 = vmatpush1.bf16.xpose.msra.mxu0 0
        %1586 = vmatprep.subr.bf16.mxu0 0
        %1587 = vmatpush1.bf16.xpose.msra.mxu0 0
        %1588 = vmatprep.subr.bf16.mxu0 0
        %1589 = vmatpush1.bf16.xpose.msra.mxu0 0
        %1590 = vmatprep.mubr.bf16.mxu0 0
        %1591 = vmatmul.mubr.bf16.gmra.mrb[0].mxu0 %v1553
        %v1592 = vpop.f32.mrb[0].mxu0
        %v1593 = vadd.f32 0.0, %v1592
        %v1594 = vpop.f32.mrb[0].mxu0
        %v1595 = vpop.f32.mrb[0].mxu0
        %v1596 = vpop.f32.mrb[0].mxu0
        %1597 = vdwg.mxu0
        %v1599 = vsel %vm999, %v996, 0
        %v1602 = vsel %vm999, %v275, 0
        %1604 = vmatprep.subr.bf16.mxu0 0
        %1605 = vmatpush1.bf16.xpose.msra.mxu0 %v1602
        %1606 = vmatprep.subr.bf16.mxu0 0
        %1607 = vmatpush1.bf16.xpose.msra.mxu0 0
        %1608 = vmatprep.subr.bf16.mxu0 0
        %1609 = vmatpush1.bf16.xpose.msra.mxu0 0
        %1610 = vmatprep.subr.bf16.mxu0 0
        %1611 = vmatpush1.bf16.xpose.msra.mxu0 0
        %1612 = vmatprep.subr.bf16.mxu0 0
        %1613 = vmatpush1.bf16.xpose.msra.mxu0 0
        %1614 = vmatprep.subr.bf16.mxu0 0
        %1615 = vmatpush1.bf16.xpose.msra.mxu0 0
        %1616 = vmatprep.subr.bf16.mxu0 0
        %1617 = vmatpush1.bf16.xpose.msra.mxu0 0
        %1618 = vmatprep.subr.bf16.mxu0 0
        %1619 = vmatpush1.bf16.xpose.msra.mxu0 0
        %1620 = vmatprep.subr.bf16.mxu0 0
        %1621 = vmatpush1.bf16.xpose.msra.mxu0 0
        %1622 = vmatprep.subr.bf16.mxu0 0
        %1623 = vmatpush1.bf16.xpose.msra.mxu0 0
        %1624 = vmatprep.subr.bf16.mxu0 0
        %1625 = vmatpush1.bf16.xpose.msra.mxu0 0
        %1626 = vmatprep.subr.bf16.mxu0 0
        %1627 = vmatpush1.bf16.xpose.msra.mxu0 0
        %1628 = vmatprep.subr.bf16.mxu0 0
        %1629 = vmatpush1.bf16.xpose.msra.mxu0 0
        %1630 = vmatprep.subr.bf16.mxu0 0
        %1631 = vmatpush1.bf16.xpose.msra.mxu0 0
        %1632 = vmatprep.subr.bf16.mxu0 0
        %1633 = vmatpush1.bf16.xpose.msra.mxu0 0
        %1634 = vmatprep.subr.bf16.mxu0 0
        %1635 = vmatpush1.bf16.xpose.msra.mxu0 0
        %1636 = vmatprep.mubr.bf16.mxu0 0
        %1637 = vmatmul.mubr.bf16.gmra.mrb[0].mxu0 %v1599
        %v1638 = vpop.f32.mrb[0].mxu0
        %v1639 = vadd.f32 0.0, %v1638
        %v1640 = vpop.f32.mrb[0].mxu0
        %v1641 = vpop.f32.mrb[0].mxu0
        %v1642 = vpop.f32.mrb[0].mxu0
        %1643 = vdwg.mxu0
        %v1645 = vsel %vm999, %v997, 0
        %v1648 = vsel %vm999, %v276, 0
        %1650 = vmatprep.subr.bf16.mxu0 0
        %1651 = vmatpush1.bf16.xpose.msra.mxu0 %v1648
        %1652 = vmatprep.subr.bf16.mxu0 0
        %1653 = vmatpush1.bf16.xpose.msra.mxu0 0
        %1654 = vmatprep.subr.bf16.mxu0 0
        %1655 = vmatpush1.bf16.xpose.msra.mxu0 0
        %1656 = vmatprep.subr.bf16.mxu0 0
        %1657 = vmatpush1.bf16.xpose.msra.mxu0 0
        %1658 = vmatprep.subr.bf16.mxu0 0
        %1659 = vmatpush1.bf16.xpose.msra.mxu0 0
        %1660 = vmatprep.subr.bf16.mxu0 0
        %1661 = vmatpush1.bf16.xpose.msra.mxu0 0
        %1662 = vmatprep.subr.bf16.mxu0 0
        %1663 = vmatpush1.bf16.xpose.msra.mxu0 0
        %1664 = vmatprep.subr.bf16.mxu0 0
        %1665 = vmatpush1.bf16.xpose.msra.mxu0 0
        %1666 = vmatprep.subr.bf16.mxu0 0
        %1667 = vmatpush1.bf16.xpose.msra.mxu0 0
        %1668 = vmatprep.subr.bf16.mxu0 0
        %1669 = vmatpush1.bf16.xpose.msra.mxu0 0
        %1670 = vmatprep.subr.bf16.mxu0 0
        %1671 = vmatpush1.bf16.xpose.msra.mxu0 0
        %1672 = vmatprep.subr.bf16.mxu0 0
        %1673 = vmatpush1.bf16.xpose.msra.mxu0 0
        %1674 = vmatprep.subr.bf16.mxu0 0
        %1675 = vmatpush1.bf16.xpose.msra.mxu0 0
        %1676 = vmatprep.subr.bf16.mxu0 0
        %1677 = vmatpush1.bf16.xpose.msra.mxu0 0
        %1678 = vmatprep.subr.bf16.mxu0 0
        %1679 = vmatpush1.bf16.xpose.msra.mxu0 0
        %1680 = vmatprep.subr.bf16.mxu0 0
        %1681 = vmatpush1.bf16.xpose.msra.mxu0 0
        %1682 = vmatprep.mubr.bf16.mxu0 0
        %1683 = vmatmul.mubr.bf16.gmra.mrb[0].mxu0 %v1645
        %v1684 = vpop.f32.mrb[0].mxu0
        %v1685 = vadd.f32 0.0, %v1684
        %v1686 = vpop.f32.mrb[0].mxu0
        %v1687 = vpop.f32.mrb[0].mxu0
        %v1688 = vpop.f32.mrb[0].mxu0
        %1689 = vdwg.mxu0
        %v1691 = vsel %vm999, %v998, 0
        %v1694 = vsel %vm999, %v277, 0
        %1696 = vmatprep.subr.bf16.mxu0 0
        %1697 = vmatpush1.bf16.xpose.msra.mxu0 %v1694
        %1698 = vmatprep.subr.bf16.mxu0 0
        %1699 = vmatpush1.bf16.xpose.msra.mxu0 0
        %1700 = vmatprep.subr.bf16.mxu0 0
        %1701 = vmatpush1.bf16.xpose.msra.mxu0 0
        %1702 = vmatprep.subr.bf16.mxu0 0
        %1703 = vmatpush1.bf16.xpose.msra.mxu0 0
        %1704 = vmatprep.subr.bf16.mxu0 0
        %1705 = vmatpush1.bf16.xpose.msra.mxu0 0
        %1706 = vmatprep.subr.bf16.mxu0 0
        %1707 = vmatpush1.bf16.xpose.msra.mxu0 0
        %1708 = vmatprep.subr.bf16.mxu0 0
        %1709 = vmatpush1.bf16.xpose.msra.mxu0 0
        %1710 = vmatprep.subr.bf16.mxu0 0
        %1711 = vmatpush1.bf16.xpose.msra.mxu0 0
        %1712 = vmatprep.subr.bf16.mxu0 0
        %1713 = vmatpush1.bf16.xpose.msra.mxu0 0
        %1714 = vmatprep.subr.bf16.mxu0 0
        %1715 = vmatpush1.bf16.xpose.msra.mxu0 0
        %1716 = vmatprep.subr.bf16.mxu0 0
        %1717 = vmatpush1.bf16.xpose.msra.mxu0 0
        %1718 = vmatprep.subr.bf16.mxu0 0
        %1719 = vmatpush1.bf16.xpose.msra.mxu0 0
        %1720 = vmatprep.subr.bf16.mxu0 0
        %1721 = vmatpush1.bf16.xpose.msra.mxu0 0
        %1722 = vmatprep.subr.bf16.mxu0 0
        %1723 = vmatpush1.bf16.xpose.msra.mxu0 0
        %1724 = vmatprep.subr.bf16.mxu0 0
        %1725 = vmatpush1.bf16.xpose.msra.mxu0 0
        %1726 = vmatprep.subr.bf16.mxu0 0
        %1727 = vmatpush1.bf16.xpose.msra.mxu0 0
        %1728 = vmatprep.mubr.bf16.mxu0 0
        %1729 = vmatmul.mubr.bf16.gmra.mrb[0].mxu0 %v1691
        %v1730 = vpop.f32.mrb[0].mxu0
        %v1731 = vadd.f32 0.0, %v1730
        %v1732 = vpop.f32.mrb[0].mxu0
        %v1733 = vpop.f32.mrb[0].mxu0
        %v1734 = vpop.f32.mrb[0].mxu0
        %1735 = vdwg.mxu0
        %vm1736 = vcmask 58368
        %v1737 = vsel %vm1736, %v1041, -inf
        %1738 = vmax.xlane.f32.xlu0 %v1737
        %v1739 = vpop.xlane.xlu0 %1738
        %v1740 = vsel %vm1736, %v1087, -inf
        %1741 = vmax.xlane.f32.xlu0 %v1740
        %v1742 = vpop.xlane.xlu0 %1741
        %v1743 = vsel %vm1736, %v1133, -inf
        %1744 = vmax.xlane.f32.xlu0 %v1743
        %v1745 = vpop.xlane.xlu0 %1744
        %v1746 = vsel %vm1736, %v1179, -inf
        %1747 = vmax.xlane.f32.xlu0 %v1746
        %v1748 = vpop.xlane.xlu0 %1747
        %v1749 = vsel %vm1736, %v1225, -inf
        %1750 = vmax.xlane.f32.xlu0 %v1749
        %v1751 = vpop.xlane.xlu0 %1750
        %v1752 = vsel %vm1736, %v1271, -inf
        %1753 = vmax.xlane.f32.xlu0 %v1752
        %v1754 = vpop.xlane.xlu0 %1753
        %v1755 = vsel %vm1736, %v1317, -inf
        %1756 = vmax.xlane.f32.xlu0 %v1755
        %v1757 = vpop.xlane.xlu0 %1756
        %v1758 = vsel %vm1736, %v1363, -inf
        %1759 = vmax.xlane.f32.xlu0 %v1758
        %v1760 = vpop.xlane.xlu0 %1759
        %v1761 = vsel %vm1736, %v1409, -inf
        %1762 = vmax.xlane.f32.xlu0 %v1761
        %v1763 = vpop.xlane.xlu0 %1762
        %v1764 = vsel %vm1736, %v1455, -inf
        %1765 = vmax.xlane.f32.xlu0 %v1764
        %v1766 = vpop.xlane.xlu0 %1765
        %v1767 = vsel %vm1736, %v1501, -inf
        %1768 = vmax.xlane.f32.xlu0 %v1767
        %v1769 = vpop.xlane.xlu0 %1768
        %v1770 = vsel %vm1736, %v1547, -inf
        %1771 = vmax.xlane.f32.xlu0 %v1770
        %v1772 = vpop.xlane.xlu0 %1771
        %v1773 = vsel %vm1736, %v1593, -inf
        %1774 = vmax.xlane.f32.xlu0 %v1773
        %v1775 = vpop.xlane.xlu0 %1774
        %v1776 = vsel %vm1736, %v1639, -inf
        %1777 = vmax.xlane.f32.xlu0 %v1776
        %v1778 = vpop.xlane.xlu0 %1777
        %v1779 = vsel %vm1736, %v1685, -inf
        %1780 = vmax.xlane.f32.xlu0 %v1779
        %v1781 = vpop.xlane.xlu0 %1780
        %v1782 = vsel %vm1736, %v1731, -inf
        %1783 = vmax.xlane.f32.xlu0 %v1782
        %v1784 = vpop.xlane.xlu0 %1783
        %v1785 = vsub.f32 %v1041, %v1739
        %v1786 = vsub.f32 %v1087, %v1742
        %v1787 = vsub.f32 %v1133, %v1745
        %v1788 = vsub.f32 %v1179, %v1748
        %v1789 = vsub.f32 %v1225, %v1751
        %v1790 = vsub.f32 %v1271, %v1754
        %v1791 = vsub.f32 %v1317, %v1757
        %v1792 = vsub.f32 %v1363, %v1760
        %v1793 = vsub.f32 %v1409, %v1763
        %v1794 = vsub.f32 %v1455, %v1766
        %v1795 = vsub.f32 %v1501, %v1769
        %v1796 = vsub.f32 %v1547, %v1772
        %v1797 = vsub.f32 %v1593, %v1775
        %v1798 = vsub.f32 %v1639, %v1778
        %v1799 = vsub.f32 %v1685, %v1781
        %v1800 = vsub.f32 %v1731, %v1784
        %v1801 = vmul.f32 %v1785, 1.442695
        %v1802 = vpow.pop %v1801
        %v1803 = vmul.f32 %v1786, 1.442695
        %v1804 = vpow.pop %v1803
        %v1805 = vmul.f32 %v1787, 1.442695
        %v1806 = vpow.pop %v1805
        %v1807 = vmul.f32 %v1788, 1.442695
        %v1808 = vpow.pop %v1807
        %v1809 = vmul.f32 %v1789, 1.442695
        %v1810 = vpow.pop %v1809
        %v1811 = vmul.f32 %v1790, 1.442695
        %v1812 = vpow.pop %v1811
        %v1813 = vmul.f32 %v1791, 1.442695
        %v1814 = vpow.pop %v1813
        %v1815 = vmul.f32 %v1792, 1.442695
        %v1816 = vpow.pop %v1815
        %v1817 = vmul.f32 %v1793, 1.442695
        %v1818 = vpow.pop %v1817
        %v1819 = vmul.f32 %v1794, 1.442695
        %v1820 = vpow.pop %v1819
        %v1821 = vmul.f32 %v1795, 1.442695
        %v1822 = vpow.pop %v1821
        %v1823 = vmul.f32 %v1796, 1.442695
        %v1824 = vpow.pop %v1823
        %v1825 = vmul.f32 %v1797, 1.442695
        %v1826 = vpow.pop %v1825
        %v1827 = vmul.f32 %v1798, 1.442695
        %v1828 = vpow.pop %v1827
        %v1829 = vmul.f32 %v1799, 1.442695
        %v1830 = vpow.pop %v1829
        %v1831 = vmul.f32 %v1800, 1.442695
        %v1832 = vpow.pop %v1831
        %v1833 = vsel %vm1736, %v1802, 0.0
        %1834 = vadd.xlane.f32.xlu0 %v1833
        %v1835 = vpop.xlane.xlu0 %1834
        %v1836 = vsel %vm1736, %v1804, 0.0
        %1837 = vadd.xlane.f32.xlu0 %v1836
        %v1838 = vpop.xlane.xlu0 %1837
        %v1839 = vsel %vm1736, %v1806, 0.0
        %1840 = vadd.xlane.f32.xlu0 %v1839
        %v1841 = vpop.xlane.xlu0 %1840
        %v1842 = vsel %vm1736, %v1808, 0.0
        %1843 = vadd.xlane.f32.xlu0 %v1842
        %v1844 = vpop.xlane.xlu0 %1843
        %v1845 = vsel %vm1736, %v1810, 0.0
        %1846 = vadd.xlane.f32.xlu0 %v1845
        %v1847 = vpop.xlane.xlu0 %1846
        %v1848 = vsel %vm1736, %v1812, 0.0
        %1849 = vadd.xlane.f32.xlu0 %v1848
        %v1850 = vpop.xlane.xlu0 %1849
        %v1851 = vsel %vm1736, %v1814, 0.0
        %1852 = vadd.xlane.f32.xlu0 %v1851
        %v1853 = vpop.xlane.xlu0 %1852
        %v1854 = vsel %vm1736, %v1816, 0.0
        %1855 = vadd.xlane.f32.xlu0 %v1854
        %v1856 = vpop.xlane.xlu0 %1855
        %v1857 = vsel %vm1736, %v1818, 0.0
        %1858 = vadd.xlane.f32.xlu0 %v1857
        %v1859 = vpop.xlane.xlu0 %1858
        %v1860 = vsel %vm1736, %v1820, 0.0
        %1861 = vadd.xlane.f32.xlu0 %v1860
        %v1862 = vpop.xlane.xlu0 %1861
        %v1863 = vsel %vm1736, %v1822, 0.0
        %1864 = vadd.xlane.f32.xlu0 %v1863
        %v1865 = vpop.xlane.xlu0 %1864
        %v1866 = vsel %vm1736, %v1824, 0.0
        %1867 = vadd.xlane.f32.xlu0 %v1866
        %v1868 = vpop.xlane.xlu0 %1867
        %v1869 = vsel %vm1736, %v1826, 0.0
        %1870 = vadd.xlane.f32.xlu0 %v1869
        %v1871 = vpop.xlane.xlu0 %1870
        %v1872 = vsel %vm1736, %v1828, 0.0
        %1873 = vadd.xlane.f32.xlu0 %v1872
        %v1874 = vpop.xlane.xlu0 %1873
        %v1875 = vsel %vm1736, %v1830, 0.0
        %1876 = vadd.xlane.f32.xlu0 %v1875
        %v1877 = vpop.xlane.xlu0 %1876
        %v1878 = vsel %vm1736, %v1832, 0.0
        %1879 = vadd.xlane.f32.xlu0 %v1878
        %v1880 = vpop.xlane.xlu0 %1879
        %v1881 = vrcp.pop %v1835
        %v1882 = vmul.f32 %v1802, %v1881
        %v1883 = vrcp.pop %v1838
        %v1884 = vmul.f32 %v1804, %v1883
        %v1885 = vrcp.pop %v1841
        %v1886 = vmul.f32 %v1806, %v1885
        %v1887 = vrcp.pop %v1844
        %v1888 = vmul.f32 %v1808, %v1887
        %v1889 = vrcp.pop %v1847
        %v1890 = vmul.f32 %v1810, %v1889
        %v1891 = vrcp.pop %v1850
        %v1892 = vmul.f32 %v1812, %v1891
        %v1893 = vrcp.pop %v1853
        %v1894 = vmul.f32 %v1814, %v1893
        %v1895 = vrcp.pop %v1856
        %v1896 = vmul.f32 %v1816, %v1895
        %v1897 = vrcp.pop %v1859
        %v1898 = vmul.f32 %v1818, %v1897
        %v1899 = vrcp.pop %v1862
        %v1900 = vmul.f32 %v1820, %v1899
        %v1901 = vrcp.pop %v1865
        %v1902 = vmul.f32 %v1822, %v1901
        %v1903 = vrcp.pop %v1868
        %v1904 = vmul.f32 %v1824, %v1903
        %v1905 = vrcp.pop %v1871
        %v1906 = vmul.f32 %v1826, %v1905
        %v1907 = vrcp.pop %v1874
        %v1908 = vmul.f32 %v1828, %v1907
        %v1909 = vrcp.pop %v1877
        %v1910 = vmul.f32 %v1830, %v1909
        %v1911 = vrcp.pop %v1880
        %v1912 = vmul.f32 %v1832, %v1911
        %1913 = vst.msk [vmem:[%s242] sm:$0x3] %vm1736, %v1882
        %s1914 = scalar_lea.vmem %s242, 2 [#allocation8]
        %1915 = vst.msk [vmem:[%s1914] sm:$0x3] %vm1736, %v1041
        %1917 = vrot.lane.b32.xlu0 %v1884, 8
        %v1918 = vpop.permute.xlu0 %1917
        %vm1920 = vcmask 123968
        %1921 = vst.msk [vmem:[%s242] sm:$0x3] %vm1920, %v1918
        %1923 = vrot.lane.b32.xlu0 %v1087, 8
        %v1924 = vpop.permute.xlu0 %1923
        %1926 = vst.msk [vmem:[%s1914] sm:$0x3] %vm1920, %v1924
        %1928 = vrot.lane.b32.xlu0 %v1886, 16
        %v1929 = vpop.permute.xlu0 %1928
        %vm1931 = vcmask 189568
        %1932 = vst.msk [vmem:[%s242] sm:$0x3] %vm1931, %v1929
        %1934 = vrot.lane.b32.xlu0 %v1133, 16
        %v1935 = vpop.permute.xlu0 %1934
        %1937 = vst.msk [vmem:[%s1914] sm:$0x3] %vm1931, %v1935
        %1939 = vrot.lane.b32.xlu0 %v1888, 24
        %v1940 = vpop.permute.xlu0 %1939
        %vm1942 = vcmask 255168
        %1943 = vst.msk [vmem:[%s242] sm:$0x3] %vm1942, %v1940
        %1945 = vrot.lane.b32.xlu0 %v1179, 24
        %v1946 = vpop.permute.xlu0 %1945
        %1948 = vst.msk [vmem:[%s1914] sm:$0x3] %vm1942, %v1946
        %1950 = vrot.lane.b32.xlu0 %v1890, 32
        %v1951 = vpop.permute.xlu0 %1950
        %vm1953 = vcmask 320768
        %1954 = vst.msk [vmem:[%s242] sm:$0x3] %vm1953, %v1951
        %1956 = vrot.lane.b32.xlu0 %v1225, 32
        %v1957 = vpop.permute.xlu0 %1956
        %1959 = vst.msk [vmem:[%s1914] sm:$0x3] %vm1953, %v1957
        %1961 = vrot.lane.b32.xlu0 %v1892, 40
        %v1962 = vpop.permute.xlu0 %1961
        %vm1964 = vcmask 386368
        %1965 = vst.msk [vmem:[%s242] sm:$0x3] %vm1964, %v1962
        %1967 = vrot.lane.b32.xlu0 %v1271, 40
        %v1968 = vpop.permute.xlu0 %1967
        %1970 = vst.msk [vmem:[%s1914] sm:$0x3] %vm1964, %v1968
        %1972 = vrot.lane.b32.xlu0 %v1894, 48
        %v1973 = vpop.permute.xlu0 %1972
        %vm1975 = vcmask 451968
        %1976 = vst.msk [vmem:[%s242] sm:$0x3] %vm1975, %v1973
        %1978 = vrot.lane.b32.xlu0 %v1317, 48
        %v1979 = vpop.permute.xlu0 %1978
        %1981 = vst.msk [vmem:[%s1914] sm:$0x3] %vm1975, %v1979
        %1983 = vrot.lane.b32.xlu0 %v1896, 56
        %v1984 = vpop.permute.xlu0 %1983
        %vm1986 = vcmask 517568
        %1987 = vst.msk [vmem:[%s242] sm:$0x3] %vm1986, %v1984
        %1989 = vrot.lane.b32.xlu0 %v1363, 56
        %v1990 = vpop.permute.xlu0 %1989
        %1992 = vst.msk [vmem:[%s1914] sm:$0x3] %vm1986, %v1990
        %1994 = vrot.lane.b32.xlu0 %v1898, 64
        %v1995 = vpop.permute.xlu0 %1994
        %vm1997 = vcmask 583168
        %1998 = vst.msk [vmem:[%s242] sm:$0x3] %vm1997, %v1995
        %2000 = vrot.lane.b32.xlu0 %v1409, 64
        %v2001 = vpop.permute.xlu0 %2000
        %2003 = vst.msk [vmem:[%s1914] sm:$0x3] %vm1997, %v2001
        %2005 = vrot.lane.b32.xlu0 %v1900, 72
        %v2006 = vpop.permute.xlu0 %2005
        %vm2008 = vcmask 648768
        %2009 = vst.msk [vmem:[%s242] sm:$0x3] %vm2008, %v2006
        %2011 = vrot.lane.b32.xlu0 %v1455, 72
        %v2012 = vpop.permute.xlu0 %2011
        %2014 = vst.msk [vmem:[%s1914] sm:$0x3] %vm2008, %v2012
        %2016 = vrot.lane.b32.xlu0 %v1902, 80
        %v2017 = vpop.permute.xlu0 %2016
        %vm2019 = vcmask 714368
        %2020 = vst.msk [vmem:[%s242] sm:$0x3] %vm2019, %v2017
        %2022 = vrot.lane.b32.xlu0 %v1501, 80
        %v2023 = vpop.permute.xlu0 %2022
        %2025 = vst.msk [vmem:[%s1914] sm:$0x3] %vm2019, %v2023
        %2027 = vrot.lane.b32.xlu0 %v1904, 88
        %v2028 = vpop.permute.xlu0 %2027
        %vm2030 = vcmask 779968
        %2031 = vst.msk [vmem:[%s242] sm:$0x3] %vm2030, %v2028
        %2033 = vrot.lane.b32.xlu0 %v1547, 88
        %v2034 = vpop.permute.xlu0 %2033
        %2036 = vst.msk [vmem:[%s1914] sm:$0x3] %vm2030, %v2034
        %2038 = vrot.lane.b32.xlu0 %v1906, 96
        %v2039 = vpop.permute.xlu0 %2038
        %vm2041 = vcmask 845568
        %2042 = vst.msk [vmem:[%s242] sm:$0x3] %vm2041, %v2039
        %2044 = vrot.lane.b32.xlu0 %v1593, 96
        %v2045 = vpop.permute.xlu0 %2044
        %2047 = vst.msk [vmem:[%s1914] sm:$0x3] %vm2041, %v2045
        %2049 = vrot.lane.b32.xlu0 %v1908, 104
        %v2050 = vpop.permute.xlu0 %2049
        %vm2052 = vcmask 911168
        %2053 = vst.msk [vmem:[%s242] sm:$0x3] %vm2052, %v2050
        %2055 = vrot.lane.b32.xlu0 %v1639, 104
        %v2056 = vpop.permute.xlu0 %2055
        %2058 = vst.msk [vmem:[%s1914] sm:$0x3] %vm2052, %v2056
        %2060 = vrot.lane.b32.xlu0 %v1910, 112
        %v2061 = vpop.permute.xlu0 %2060
        %vm2063 = vcmask 976768
        %2064 = vst.msk [vmem:[%s242] sm:$0x3] %vm2063, %v2061
        %2066 = vrot.lane.b32.xlu0 %v1685, 112
        %v2067 = vpop.permute.xlu0 %2066
        %2069 = vst.msk [vmem:[%s1914] sm:$0x3] %vm2063, %v2067
        %2071 = vrot.lane.b32.xlu0 %v1912, 120
        %v2072 = vpop.permute.xlu0 %2071
        %vm2074 = vcmask 1042368
        %2075 = vst.msk [vmem:[%s242] sm:$0x3] %vm2074, %v2072
        %2077 = vrot.lane.b32.xlu0 %v1731, 120
        %v2078 = vpop.permute.xlu0 %2077
        %2080 = vst.msk [vmem:[%s1914] sm:$0x3] %vm2074, %v2078
        %s2081 = sand.u32 %s104, 1
        %s2082 = scalar_lea.sflag [#allocation4], %s2081
        %s2083 = sand.u32 %s104, 1
        %s2084 = smul.addr %s2083, 4
        %s2085 = scalar_lea.vmem [#allocation8], %s2084
        // Predicated region
        $region45: #{tpu_custom_call.1} parent=31 // pred_check
          %p2086 = pneg %p114
        $region46: #{tpu_custom_call.1} parent=31 // pred_check_branch
          %2088 = sbr.rel (%p2086) target = $region48
        $region47: #{tpu_custom_call.1} parent=31 // pred_region
          %s2090 = ssub.s32 64, 64
          %2091 = vsyncadd %s2082, %s2090
          %s2092 = smul.addr %s23, 32
          %s2093 = scalar_lea.hbm %s3, %s2092
          %s2094 = sshll.u32 %s2085, 4
          %s2095 = int_to_ptr.vmem [resolvable:$true] %s2094
          %2100 = dma.vmem_to_hbm [thread:$0]  %s2095, 64, %s2093, %s2082, 32, 64, 2
        $region48: #{tpu_custom_call.1} parent=31 // pred_fallthru
          _
      $region32: #{tpu_custom_call.1} parent=5 // pred_fallthru
        _
      %p2101 = scmp.le.s32.totalorder 2, %s18
      // Predicated region
      $region49: #{tpu_custom_call.1} parent=5 // pred_check
        %p2102 = pneg %p2101
      $region50: #{tpu_custom_call.1} parent=5 // pred_check_branch
        %2104 = sbr.rel (%p2102) target = $region52
      $region51: #{tpu_custom_call.1} parent=5 // pred_region
        %s2105 = ssub.s32 %s18, 2
        // Predicated region
        $region53: #{tpu_custom_call.1} parent=51 // pred_check
          %p2106 = pneg %p120
        $region54: #{tpu_custom_call.1} parent=51 // pred_check_branch
          %2108 = sbr.rel (%p2106) target = $region56
        $region55: #{tpu_custom_call.1} parent=51 // pred_region
          %s2109 = sand.u32 %s105, 1
          %s2110 = scalar_lea.sflag [#allocation4], %s2109
          %s2111 = sand.u32 %s105, 1
          %s2112 = smul.addr %s2111, 4
          %s2113 = scalar_lea.vmem [#allocation8], %s2112
          %2114 = dma.done %s2110, 64
        $region56: #{tpu_custom_call.1} parent=51 // pred_fallthru
          _
      $region52: #{tpu_custom_call.1} parent=5 // pred_fallthru
        _
    $region6: #{tpu_custom_call.1} parent=1 // loop_footer
      %s22 = sadd.s32 1, %s18
    $region7: #{tpu_custom_call.1} parent=1 // loop_footer_branch
      %17 = sbr.rel target = $region3
    $region8: #{tpu_custom_call.1} parent=1 // loop_exit
      _
    %2115 = vsyncpa [#allocation3], 1
    %s2116 = scalar_lea.sflag [#allocation3], 1
    %2117 = vsyncpa %s2116, 1
    %2118 = vsyncpa [#allocation6], 1
    %s2119 = scalar_lea.sflag [#allocation6], 1
    %2120 = vsyncpa %s2119, 1
    %2121 = vsyncpa [#allocation4], 1
    %s2122 = scalar_lea.sflag [#allocation4], 1
    %2123 = vsyncpa %s2122, 1

</llo_original>
